<compile_context>
chip_gen: v5e
topology: v5e:2x2
jax: 0.10.0
libtpu: 0.0.40
codegen_flags: <defaults>
</compile_context>

<pallas_src>
import jax
import jax.numpy as jnp
from jax.experimental import pallas as pl
from jax.experimental.pallas import tpu as pltpu


# ----------------------------------------------------------------------------
# Pallas kernels
# ----------------------------------------------------------------------------
def conv_relu_pool_kernel(p_ref, w_ref, b_ref, o_ref):
    """Fused conv (as matmul) + bias + ReLU + 2x2 max-pool.

    p_ref : [4, CKK, TQ] bf16  -- im2col patches grouped by pooling corner
    w_ref : [OC, CKK]    bf16  -- conv weights, rows flattened as (c, kh, kw)
    b_ref : [OC, 1]      f32   -- conv bias (broadcasts over lanes)
    o_ref : [OC, TQ]     f32   -- pooled activations, lanes = (b, ph, pw)
    """
    w = w_ref[...]
    a0 = jnp.dot(w, p_ref[0], preferred_element_type=jnp.float32)
    a1 = jnp.dot(w, p_ref[1], preferred_element_type=jnp.float32)
    a2 = jnp.dot(w, p_ref[2], preferred_element_type=jnp.float32)
    a3 = jnp.dot(w, p_ref[3], preferred_element_type=jnp.float32)
    # Max over the 4 pooling-window corners; per-channel bias and monotone ReLU
    # commute with the max, so this equals max_pool2d(relu(conv(x) + b), 2).
    m = jnp.maximum(jnp.maximum(a0, a1), jnp.maximum(a2, a3))
    o_ref[...] = jnp.maximum(m + b_ref[...], 0.0).astype(o_ref.dtype)


def fc_stack_kernel(x_ref, w1_ref, b1_ref, w2_ref, b2_ref, w3_ref, b3_ref, o_ref):
    """Fused fc1 -> ReLU -> fc2 -> ReLU -> fc3 (single launch, no HBM hops)."""
    h = jnp.dot(x_ref[...], w1_ref[...], preferred_element_type=jnp.float32)
    h = jnp.maximum(h + b1_ref[...], 0.0).astype(jnp.bfloat16)
    h = jnp.dot(h, w2_ref[...], preferred_element_type=jnp.float32)
    h = jnp.maximum(h + b2_ref[...], 0.0).astype(jnp.bfloat16)
    o = jnp.dot(h, w3_ref[...], preferred_element_type=jnp.float32) + b3_ref[...]
    o_ref[...] = o.astype(o_ref.dtype)


# ----------------------------------------------------------------------------
# Glue + Pallas wrappers
# ----------------------------------------------------------------------------
def _corner_patches(x_cbhw, K):
    """im2col with output pixels grouped by 2x2-pool corner (XLA data movement).

    x_cbhw: [C, B, H, W] -> [4, C*K*K, B*(OH//2)*(OW//2)]
    corner = (oh % 2) * 2 + (ow % 2); within a corner, columns are (b, ph, pw).
    Rows are ordered (c, kh, kw), matching torch's weight.reshape(OC, C*K*K).
    """
    C, B, H, W = x_cbhw.shape
    OH, OW = H - K + 1, W - K + 1
    assert OH % 2 == 0 and OW % 2 == 0, "fused 2x2 pool needs even conv output"
    POH, POW = OH // 2, OW // 2
    cols = [x_cbhw[:, :, i:i + OH, j:j + OW] for i in range(K) for j in range(K)]
    p = jnp.stack(cols, axis=1)                      # [C, K*K, B, OH, OW]
    p = p.reshape(C, K * K, B, POH, 2, POW, 2)
    p = p.transpose(4, 6, 0, 1, 2, 3, 5)             # [2, 2, C, K*K, B, POH, POW]
    return p.reshape(4, C * K * K, B * POH * POW)


def conv_relu_pool(x_cbhw, w_mat, b_col, K):
    """x: [C, B, H, W] f32 -> [OC, B, OH//2, OW//2] f32 (conv+relu+pool)."""
    C, B, H, W = x_cbhw.shape
    OC, CKK = w_mat.shape
    OH, OW = H - K + 1, W - K + 1
    POH, POW = OH // 2, OW // 2
    Q = B * POH * POW

    patches = _corner_patches(x_cbhw, K).astype(jnp.bfloat16)

    TQ = Q if Q <= 512 else 512          # lane tile (multiple of 128 when tiled)
    nq = pl.cdiv(Q, TQ)

    out = pl.pallas_call(
        conv_relu_pool_kernel,
        out_shape=jax.ShapeDtypeStruct((OC, Q), jnp.float32),
        grid=(nq,),
        in_specs=[
            pl.BlockSpec((4, CKK, TQ), lambda i: (0, 0, i)),
            pl.BlockSpec((OC, CKK), lambda i: (0, 0)),
            pl.BlockSpec((OC, 1), lambda i: (0, 0)),
        ],
        out_specs=pl.BlockSpec((OC, TQ), lambda i: (0, i)),
        compiler_params=pltpu.CompilerParams(
            dimension_semantics=("parallel",)),
    )(patches, w_mat, b_col)
    return out.reshape(OC, B, POH, POW)


def fc_stack(xfc, params):
    """xfc: [B, 400] bf16 -> logits [B, 10] f32, one fused pallas_call."""
    B = xfc.shape[0]
    w1, b1 = params["fc1_wm"], params["fc1_br"]
    w2, b2 = params["fc2_wm"], params["fc2_br"]
    w3, b3 = params["fc3_wm"], params["fc3_br"]

    def full(shape):
        return pl.BlockSpec(shape, lambda: (0, 0))

    return pl.pallas_call(
        fc_stack_kernel,
        out_shape=jax.ShapeDtypeStruct((B, w3.shape[1]), jnp.float32),
        in_specs=[full(xfc.shape), full(w1.shape), full(b1.shape),
                  full(w2.shape), full(b2.shape), full(w3.shape), full(b3.shape)],
        out_specs=full((B, w3.shape[1])),
    )(xfc, w1, b1, w2, b2, w3, b3)


# ----------------------------------------------------------------------------
# Parameters (PyTorch-like init, then ONE-TIME layout prep for the kernels)
# ----------------------------------------------------------------------------
def init_lenet_params(key):
    def uniform(k, shape, fan_in):
        bound = 1.0 / jnp.sqrt(jnp.float32(fan_in))
        return jax.random.uniform(k, shape, jnp.float32, -bound, bound)

    ks = jax.random.split(key, 10)
    return {
        "conv1_w": uniform(ks[0], (6, 3, 5, 5), 3 * 5 * 5),
        "conv1_b": uniform(ks[1], (6,), 3 * 5 * 5),
        "conv2_w": uniform(ks[2], (16, 6, 5, 5), 6 * 5 * 5),
        "conv2_b": uniform(ks[3], (16,), 6 * 5 * 5),
        "fc1_w": uniform(ks[4], (120, 16 * 5 * 5), 16 * 5 * 5),
        "fc1_b": uniform(ks[5], (120,), 16 * 5 * 5),
        "fc2_w": uniform(ks[6], (84, 120), 120),
        "fc2_b": uniform(ks[7], (84,), 120),
        "fc3_w": uniform(ks[8], (10, 84), 84),
        "fc3_b": uniform(ks[9], (10,), 84),
    }


def prepare_params(raw):
    """Reshape/transpose/cast weights once so the forward pass has zero
    per-call weight layout ops (bf16 matmul operands, f32 biases)."""
    return {
        "conv1_wm": raw["conv1_w"].reshape(6, 3 * 25).astype(jnp.bfloat16),
        "conv1_bc": raw["conv1_b"].reshape(6, 1).astype(jnp.float32),
        "conv2_wm": raw["conv2_w"].reshape(16, 6 * 25).astype(jnp.bfloat16),
        "conv2_bc": raw["conv2_b"].reshape(16, 1).astype(jnp.float32),
        "fc1_wm": raw["fc1_w"].T.astype(jnp.bfloat16),        # [400, 120]
        "fc1_br": raw["fc1_b"].reshape(1, 120).astype(jnp.float32),
        "fc2_wm": raw["fc2_w"].T.astype(jnp.bfloat16),        # [120, 84]
        "fc2_br": raw["fc2_b"].reshape(1, 84).astype(jnp.float32),
        "fc3_wm": raw["fc3_w"].T.astype(jnp.bfloat16),        # [84, 10]
        "fc3_br": raw["fc3_b"].reshape(1, 10).astype(jnp.float32),
    }


# ----------------------------------------------------------------------------
# Forward pass (matches PyTorch LeNet.forward semantics)
# ----------------------------------------------------------------------------
def lenet_forward(params, x):
    """x: [B, 3, 32, 32] (NCHW, like PyTorch) -> logits [B, 10] f32."""
    B = x.shape[0]
    x_cbhw = jnp.transpose(x, (1, 0, 2, 3))                       # [3, B, 32, 32]
    h = conv_relu_pool(x_cbhw, params["conv1_wm"], params["conv1_bc"], K=5)
    # -> [6, B, 14, 14]
    h = conv_relu_pool(h, params["conv2_wm"], params["conv2_bc"], K=5)
    # -> [16, B, 5, 5]
    # flatten to PyTorch's out.view(B, -1) order: per batch (c, h, w)
    xfc = jnp.transpose(h.reshape(16, B, 25), (1, 0, 2)).reshape(B, 400)
    xfc = xfc.astype(jnp.bfloat16)
    return fc_stack(xfc, params)                                  # [B, 10] f32


if __name__ == "__main__":
    key = jax.random.PRNGKey(0)
    pkey, xkey = jax.random.split(key)
    params = prepare_params(init_lenet_params(pkey))
    # fc1 (16*5*5) fixes the spatial size at 32x32; small batch for the test.
    x = jax.random.normal(xkey, (2, 3, 32, 32), jnp.float32)
    logits = jax.jit(lenet_forward)(params, x)
    jax.block_until_ready(logits)
    assert logits.shape == (2, 10) and logits.dtype == jnp.float32
    print("KERNEL_OK")
</pallas_src>

<mosaic_0001>
module attributes {stable_mosaic.version = 11 : i64} {
  func.func @conv_relu_pool_kernel(%arg0: i32, %arg1: memref<4x75x392xbf16, #tpu.memory_space<vmem>>, %arg2: memref<6x75xbf16, #tpu.memory_space<vmem>>, %arg3: memref<6x1xf32, #tpu.memory_space<vmem>>, %arg4: memref<6x392xf32, #tpu.memory_space<vmem>>) attributes {dimension_semantics = [#tpu.dimension_semantics<parallel>], iteration_bounds = array<i64: 1>, scalar_prefetch = 0 : i64, scratch_operands = 0 : i64, tpu.core_type = #tpu.core_type<tc>, window_params = [{transform_indices = @transform_0, window_bounds = array<i64: 4, 75, 392>}, {pipeline_mode = #tpu.pipeline_mode<synchronous>, transform_indices = @transform_1, window_bounds = array<i64: 6, 75>}, {pipeline_mode = #tpu.pipeline_mode<synchronous>, transform_indices = @transform_2, window_bounds = array<i64: 6, 1>}, {transform_indices = @transform_3, window_bounds = array<i64: 6, 392>}]} {
    %c0 = arith.constant 0 : index
    %c0_0 = arith.constant 0 : index
    %0 = vector.load %arg2[%c0, %c0_0] : memref<6x75xbf16, #tpu.memory_space<vmem>>, vector<6x75xbf16>
    %c0_1 = arith.constant 0 : index
    %c0_2 = arith.constant 0 : index
    %c0_3 = arith.constant 0 : index
    %1 = vector.load %arg1[%c0_1, %c0_2, %c0_3] : memref<4x75x392xbf16, #tpu.memory_space<vmem>>, vector<1x75x392xbf16>
    %2 = vector.shape_cast %1 : vector<1x75x392xbf16> to vector<75x392xbf16>
    %cst = arith.constant dense<0.000000e+00> : vector<6x392xf32>
    %3 = tpu.matmul %0, %2, %cst {dimension_numbers = #tpu.dot_dimension_numbers<[1], [0], [0], [1], [0, 0, 1, 1], [], []>} : vector<6x75xbf16>, vector<75x392xbf16>, vector<6x392xf32> -> vector<6x392xf32>
    %c1 = arith.constant 1 : index
    %c0_4 = arith.constant 0 : index
    %c0_5 = arith.constant 0 : index
    %4 = vector.load %arg1[%c1, %c0_4, %c0_5] : memref<4x75x392xbf16, #tpu.memory_space<vmem>>, vector<1x75x392xbf16>
    %5 = vector.shape_cast %4 : vector<1x75x392xbf16> to vector<75x392xbf16>
    %cst_6 = arith.constant dense<0.000000e+00> : vector<6x392xf32>
    %6 = tpu.matmul %0, %5, %cst_6 {dimension_numbers = #tpu.dot_dimension_numbers<[1], [0], [0], [1], [0, 0, 1, 1], [], []>} : vector<6x75xbf16>, vector<75x392xbf16>, vector<6x392xf32> -> vector<6x392xf32>
    %c2 = arith.constant 2 : index
    %c0_7 = arith.constant 0 : index
    %c0_8 = arith.constant 0 : index
    %7 = vector.load %arg1[%c2, %c0_7, %c0_8] : memref<4x75x392xbf16, #tpu.memory_space<vmem>>, vector<1x75x392xbf16>
    %8 = vector.shape_cast %7 : vector<1x75x392xbf16> to vector<75x392xbf16>
    %cst_9 = arith.constant dense<0.000000e+00> : vector<6x392xf32>
    %9 = tpu.matmul %0, %8, %cst_9 {dimension_numbers = #tpu.dot_dimension_numbers<[1], [0], [0], [1], [0, 0, 1, 1], [], []>} : vector<6x75xbf16>, vector<75x392xbf16>, vector<6x392xf32> -> vector<6x392xf32>
    %c3 = arith.constant 3 : index
    %c0_10 = arith.constant 0 : index
    %c0_11 = arith.constant 0 : index
    %10 = vector.load %arg1[%c3, %c0_10, %c0_11] : memref<4x75x392xbf16, #tpu.memory_space<vmem>>, vector<1x75x392xbf16>
    %11 = vector.shape_cast %10 : vector<1x75x392xbf16> to vector<75x392xbf16>
    %cst_12 = arith.constant dense<0.000000e+00> : vector<6x392xf32>
    %12 = tpu.matmul %0, %11, %cst_12 {dimension_numbers = #tpu.dot_dimension_numbers<[1], [0], [0], [1], [0, 0, 1, 1], [], []>} : vector<6x75xbf16>, vector<75x392xbf16>, vector<6x392xf32> -> vector<6x392xf32>
    %13 = arith.maximumf %3, %6 : vector<6x392xf32>
    %14 = arith.maximumf %9, %12 : vector<6x392xf32>
    %15 = arith.maximumf %13, %14 : vector<6x392xf32>
    %c0_13 = arith.constant 0 : index
    %c0_14 = arith.constant 0 : index
    %16 = vector.load %arg3[%c0_13, %c0_14] : memref<6x1xf32, #tpu.memory_space<vmem>>, vector<6x1xf32>
    %17 = vector.broadcast %16 : vector<6x1xf32> to vector<6x392xf32>
    %18 = arith.addf %15, %17 : vector<6x392xf32>
    %cst_15 = arith.constant 0.000000e+00 : f32
    %19 = vector.broadcast %cst_15 : f32 to vector<6x392xf32>
    %20 = arith.maximumf %18, %19 : vector<6x392xf32>
    %c0_16 = arith.constant 0 : index
    %c0_17 = arith.constant 0 : index
    %21 = vector.load %arg4[%c0_16, %c0_17] : memref<6x392xf32, #tpu.memory_space<vmem>>, vector<6x392xf32>
    tpu.vector_store %arg4[%c0_16, %c0_17], %20 {strides = array<i32>} : memref<6x392xf32, #tpu.memory_space<vmem>>, vector<6x392xf32>,
    return
  }
  func.func @transform_0(%arg0: i32) -> (i32, i32, i32) {
    %c0_i32 = arith.constant 0 : i32
    %c0_i32_0 = arith.constant 0 : i32
    %c0_i32_1 = arith.constant 0 : i32
    return %c0_i32, %c0_i32_0, %arg0 : i32, i32, i32
  }
  func.func @transform_1(%arg0: i32) -> (i32, i32) {
    %c0_i32 = arith.constant 0 : i32
    %c0_i32_0 = arith.constant 0 : i32
    %c0_i32_1 = arith.constant 0 : i32
    return %c0_i32, %c0_i32_0 : i32, i32
  }
  func.func @transform_2(%arg0: i32) -> (i32, i32) {
    %c0_i32 = arith.constant 0 : i32
    %c0_i32_0 = arith.constant 0 : i32
    %c0_i32_1 = arith.constant 0 : i32
    return %c0_i32, %c0_i32_0 : i32, i32
  }
  func.func @transform_3(%arg0: i32) -> (i32, i32) {
    %c0_i32 = arith.constant 0 : i32
    %c0_i32_0 = arith.constant 0 : i32
    return %c0_i32, %arg0 : i32, i32
  }
}

module attributes {stable_mosaic.version = 11 : i64} {
  func.func @conv_relu_pool_kernel(%arg0: i32, %arg1: memref<4x150x50xbf16, #tpu.memory_space<vmem>>, %arg2: memref<16x150xbf16, #tpu.memory_space<vmem>>, %arg3: memref<16x1xf32, #tpu.memory_space<vmem>>, %arg4: memref<16x50xf32, #tpu.memory_space<vmem>>) attributes {dimension_semantics = [#tpu.dimension_semantics<parallel>], iteration_bounds = array<i64: 1>, scalar_prefetch = 0 : i64, scratch_operands = 0 : i64, tpu.core_type = #tpu.core_type<tc>, window_params = [{transform_indices = @transform_0, window_bounds = array<i64: 4, 150, 50>}, {pipeline_mode = #tpu.pipeline_mode<synchronous>, transform_indices = @transform_1, window_bounds = array<i64: 16, 150>}, {pipeline_mode = #tpu.pipeline_mode<synchronous>, transform_indices = @transform_2, window_bounds = array<i64: 16, 1>}, {transform_indices = @transform_3, window_bounds = array<i64: 16, 50>}]} {
    %c0 = arith.constant 0 : index
    %c0_0 = arith.constant 0 : index
    %0 = vector.load %arg2[%c0, %c0_0] : memref<16x150xbf16, #tpu.memory_space<vmem>>, vector<16x150xbf16>
    %c0_1 = arith.constant 0 : index
    %c0_2 = arith.constant 0 : index
    %c0_3 = arith.constant 0 : index
    %1 = vector.load %arg1[%c0_1, %c0_2, %c0_3] : memref<4x150x50xbf16, #tpu.memory_space<vmem>>, vector<1x150x50xbf16>
    %2 = vector.shape_cast %1 : vector<1x150x50xbf16> to vector<150x50xbf16>
    %cst = arith.constant dense<0.000000e+00> : vector<16x50xf32>
    %3 = tpu.matmul %0, %2, %cst {dimension_numbers = #tpu.dot_dimension_numbers<[1], [0], [0], [1], [0, 0, 1, 1], [], []>} : vector<16x150xbf16>, vector<150x50xbf16>, vector<16x50xf32> -> vector<16x50xf32>
    %c1 = arith.constant 1 : index
    %c0_4 = arith.constant 0 : index
    %c0_5 = arith.constant 0 : index
    %4 = vector.load %arg1[%c1, %c0_4, %c0_5] : memref<4x150x50xbf16, #tpu.memory_space<vmem>>, vector<1x150x50xbf16>
    %5 = vector.shape_cast %4 : vector<1x150x50xbf16> to vector<150x50xbf16>
    %cst_6 = arith.constant dense<0.000000e+00> : vector<16x50xf32>
    %6 = tpu.matmul %0, %5, %cst_6 {dimension_numbers = #tpu.dot_dimension_numbers<[1], [0], [0], [1], [0, 0, 1, 1], [], []>} : vector<16x150xbf16>, vector<150x50xbf16>, vector<16x50xf32> -> vector<16x50xf32>
    %c2 = arith.constant 2 : index
    %c0_7 = arith.constant 0 : index
    %c0_8 = arith.constant 0 : index
    %7 = vector.load %arg1[%c2, %c0_7, %c0_8] : memref<4x150x50xbf16, #tpu.memory_space<vmem>>, vector<1x150x50xbf16>
    %8 = vector.shape_cast %7 : vector<1x150x50xbf16> to vector<150x50xbf16>
    %cst_9 = arith.constant dense<0.000000e+00> : vector<16x50xf32>
    %9 = tpu.matmul %0, %8, %cst_9 {dimension_numbers = #tpu.dot_dimension_numbers<[1], [0], [0], [1], [0, 0, 1, 1], [], []>} : vector<16x150xbf16>, vector<150x50xbf16>, vector<16x50xf32> -> vector<16x50xf32>
    %c3 = arith.constant 3 : index
    %c0_10 = arith.constant 0 : index
    %c0_11 = arith.constant 0 : index
    %10 = vector.load %arg1[%c3, %c0_10, %c0_11] : memref<4x150x50xbf16, #tpu.memory_space<vmem>>, vector<1x150x50xbf16>
    %11 = vector.shape_cast %10 : vector<1x150x50xbf16> to vector<150x50xbf16>
    %cst_12 = arith.constant dense<0.000000e+00> : vector<16x50xf32>
    %12 = tpu.matmul %0, %11, %cst_12 {dimension_numbers = #tpu.dot_dimension_numbers<[1], [0], [0], [1], [0, 0, 1, 1], [], []>} : vector<16x150xbf16>, vector<150x50xbf16>, vector<16x50xf32> -> vector<16x50xf32>
    %13 = arith.maximumf %3, %6 : vector<16x50xf32>
    %14 = arith.maximumf %9, %12 : vector<16x50xf32>
    %15 = arith.maximumf %13, %14 : vector<16x50xf32>
    %c0_13 = arith.constant 0 : index
    %c0_14 = arith.constant 0 : index
    %16 = vector.load %arg3[%c0_13, %c0_14] : memref<16x1xf32, #tpu.memory_space<vmem>>, vector<16x1xf32>
    %17 = vector.broadcast %16 : vector<16x1xf32> to vector<16x50xf32>
    %18 = arith.addf %15, %17 : vector<16x50xf32>
    %cst_15 = arith.constant 0.000000e+00 : f32
    %19 = vector.broadcast %cst_15 : f32 to vector<16x50xf32>
    %20 = arith.maximumf %18, %19 : vector<16x50xf32>
    %c0_16 = arith.constant 0 : index
    %c0_17 = arith.constant 0 : index
    %21 = vector.load %arg4[%c0_16, %c0_17] : memref<16x50xf32, #tpu.memory_space<vmem>>, vector<16x50xf32>
    tpu.vector_store %arg4[%c0_16, %c0_17], %20 {strides = array<i32>} : memref<16x50xf32, #tpu.memory_space<vmem>>, vector<16x50xf32>,
    return
  }
  func.func @transform_0(%arg0: i32) -> (i32, i32, i32) {
    %c0_i32 = arith.constant 0 : i32
    %c0_i32_0 = arith.constant 0 : i32
    %c0_i32_1 = arith.constant 0 : i32
    return %c0_i32, %c0_i32_0, %arg0 : i32, i32, i32
  }
  func.func @transform_1(%arg0: i32) -> (i32, i32) {
    %c0_i32 = arith.constant 0 : i32
    %c0_i32_0 = arith.constant 0 : i32
    %c0_i32_1 = arith.constant 0 : i32
    return %c0_i32, %c0_i32_0 : i32, i32
  }
  func.func @transform_2(%arg0: i32) -> (i32, i32) {
    %c0_i32 = arith.constant 0 : i32
    %c0_i32_0 = arith.constant 0 : i32
    %c0_i32_1 = arith.constant 0 : i32
    return %c0_i32, %c0_i32_0 : i32, i32
  }
  func.func @transform_3(%arg0: i32) -> (i32, i32) {
    %c0_i32 = arith.constant 0 : i32
    %c0_i32_0 = arith.constant 0 : i32
    return %c0_i32, %arg0 : i32, i32
  }
}

module attributes {stable_mosaic.version = 11 : i64} {
  func.func @fc_stack_kernel(%arg0: memref<2x400xbf16, #tpu.memory_space<vmem>>, %arg1: memref<400x120xbf16, #tpu.memory_space<vmem>>, %arg2: memref<1x120xf32, #tpu.memory_space<vmem>>, %arg3: memref<120x84xbf16, #tpu.memory_space<vmem>>, %arg4: memref<1x84xf32, #tpu.memory_space<vmem>>, %arg5: memref<84x10xbf16, #tpu.memory_space<vmem>>, %arg6: memref<1x10xf32, #tpu.memory_space<vmem>>, %arg7: memref<2x10xf32, #tpu.memory_space<vmem>>) attributes {dimension_semantics = [], scalar_prefetch = 0 : i64, scratch_operands = 0 : i64, tpu.core_type = #tpu.core_type<tc>} {
    %c0 = arith.constant 0 : index
    %c0_0 = arith.constant 0 : index
    %0 = vector.load %arg0[%c0, %c0_0] : memref<2x400xbf16, #tpu.memory_space<vmem>>, vector<2x400xbf16>
    %c0_1 = arith.constant 0 : index
    %c0_2 = arith.constant 0 : index
    %1 = vector.load %arg1[%c0_1, %c0_2] : memref<400x120xbf16, #tpu.memory_space<vmem>>, vector<400x120xbf16>
    %cst = arith.constant dense<0.000000e+00> : vector<2x120xf32>
    %2 = tpu.matmul %0, %1, %cst {dimension_numbers = #tpu.dot_dimension_numbers<[1], [0], [0], [1], [0, 0, 1, 1], [], []>} : vector<2x400xbf16>, vector<400x120xbf16>, vector<2x120xf32> -> vector<2x120xf32>
    %c0_3 = arith.constant 0 : index
    %c0_4 = arith.constant 0 : index
    %3 = vector.load %arg2[%c0_3, %c0_4] : memref<1x120xf32, #tpu.memory_space<vmem>>, vector<1x120xf32>
    %4 = vector.broadcast %3 : vector<1x120xf32> to vector<2x120xf32>
    %5 = arith.addf %2, %4 : vector<2x120xf32>
    %cst_5 = arith.constant 0.000000e+00 : f32
    %6 = vector.broadcast %cst_5 : f32 to vector<2x120xf32>
    %7 = arith.maximumf %5, %6 : vector<2x120xf32>
    %8 = arith.truncf %7 : vector<2x120xf32> to vector<2x120xbf16>
    %c0_6 = arith.constant 0 : index
    %c0_7 = arith.constant 0 : index
    %9 = vector.load %arg3[%c0_6, %c0_7] : memref<120x84xbf16, #tpu.memory_space<vmem>>, vector<120x84xbf16>
    %cst_8 = arith.constant dense<0.000000e+00> : vector<2x84xf32>
    %10 = tpu.matmul %8, %9, %cst_8 {dimension_numbers = #tpu.dot_dimension_numbers<[1], [0], [0], [1], [0, 0, 1, 1], [], []>} : vector<2x120xbf16>, vector<120x84xbf16>, vector<2x84xf32> -> vector<2x84xf32>
    %c0_9 = arith.constant 0 : index
    %c0_10 = arith.constant 0 : index
    %11 = vector.load %arg4[%c0_9, %c0_10] : memref<1x84xf32, #tpu.memory_space<vmem>>, vector<1x84xf32>
    %12 = vector.broadcast %11 : vector<1x84xf32> to vector<2x84xf32>
    %13 = arith.addf %10, %12 : vector<2x84xf32>
    %cst_11 = arith.constant 0.000000e+00 : f32
    %14 = vector.broadcast %cst_11 : f32 to vector<2x84xf32>
    %15 = arith.maximumf %13, %14 : vector<2x84xf32>
    %16 = arith.truncf %15 : vector<2x84xf32> to vector<2x84xbf16>
    %c0_12 = arith.constant 0 : index
    %c0_13 = arith.constant 0 : index
    %17 = vector.load %arg5[%c0_12, %c0_13] : memref<84x10xbf16, #tpu.memory_space<vmem>>, vector<84x10xbf16>
    %cst_14 = arith.constant dense<0.000000e+00> : vector<2x10xf32>
    %18 = tpu.matmul %16, %17, %cst_14 {dimension_numbers = #tpu.dot_dimension_numbers<[1], [0], [0], [1], [0, 0, 1, 1], [], []>} : vector<2x84xbf16>, vector<84x10xbf16>, vector<2x10xf32> -> vector<2x10xf32>
    %c0_15 = arith.constant 0 : index
    %c0_16 = arith.constant 0 : index
    %19 = vector.load %arg6[%c0_15, %c0_16] : memref<1x10xf32, #tpu.memory_space<vmem>>, vector<1x10xf32>
    %20 = vector.broadcast %19 : vector<1x10xf32> to vector<2x10xf32>
    %21 = arith.addf %18, %20 : vector<2x10xf32>
    %c0_17 = arith.constant 0 : index
    %c0_18 = arith.constant 0 : index
    %22 = vector.load %arg7[%c0_17, %c0_18] : memref<2x10xf32, #tpu.memory_space<vmem>>, vector<2x10xf32>
    tpu.vector_store %arg7[%c0_17, %c0_18], %21 {strides = array<i32>} : memref<2x10xf32, #tpu.memory_space<vmem>>, vector<2x10xf32>,
    return
  }
}

</mosaic_0001>

<llo_original>
// kernel: lenet_forward.3
$region0: #{lenet_forward.3}
  #allocation0 [shape = 'u32[]', space=smem, size = 0x4, offset = 0x4, fixed_abs, tag = 'smem constant byte address 0x4 - core index']
  #allocation1 [shape = 'u32[72,128]{1,0:T(1,128)}', space=vmem, size = 0x9000, scoped, tag = 'internal scratch']
  %s0 = inlined_call_operand.vmem [shape: bf16[4,75,392], index: 0, kind: input, shape index: {}]
  %s1 = inlined_call_operand.vmem [shape: bf16[6,75], index: 1, kind: input, shape index: {}]
  %s2 = inlined_call_operand.vmem [shape: f32[6,1], index: 2, kind: input, shape index: {}]
  %s3 = inlined_call_operand.vmem [shape: f32[6,392], index: 3, kind: output, shape index: {}]
  %s4 = sld [smem:[#allocation0]]
  $region22: #{lenet_forward.3} parent=0
    _
  %s6 = ssub.s32 1, %s4
  %s7 = scalar_select 0, %s6, %s4
  // Predicated region
  $region2: #{lenet_forward.3} parent=0 // pred_check
    _
  $region3: #{lenet_forward.3} parent=0 // pred_check_branch
    %9 = sbr.rel (0) target = $region5
  $region4: #{lenet_forward.3} parent=0 // pred_region
    _
  $region5: #{lenet_forward.3} parent=0 // pred_fallthru
    _
  // Predicated region
  $region6: #{lenet_forward.3} parent=0 // pred_check
    _
  $region7: #{lenet_forward.3} parent=0 // pred_check_branch
    %11 = sbr.rel (0) target = $region9
  $region8: #{lenet_forward.3} parent=0 // pred_region
    _
  $region9: #{lenet_forward.3} parent=0 // pred_fallthru
    _
  // Predicated region
  $region10: #{lenet_forward.3} parent=0 // pred_check
    _
  $region11: #{lenet_forward.3} parent=0 // pred_check_branch
    %13 = sbr.rel (0) target = $region13
  $region12: #{lenet_forward.3} parent=0 // pred_region
    _
  $region13: #{lenet_forward.3} parent=0 // pred_fallthru
    _
  %v15 = vld [vmem:[%s1] sm:$0x7]
  %v16 = vld [vmem:[%s0] sm:$0xff]
  %v17 = vld [vmem:[%s0 + $0x8] sm:$0xff]
  %v18 = vld [vmem:[%s0 + $0x10] sm:$0xff]
  %v19 = vld [vmem:[%s0 + $0x18] sm:$0xff]
  %v20 = vld [vmem:[%s0 + $0x20] sm:$0xff]
  %v21 = vld [vmem:[%s0 + $0x28] sm:$0xff]
  %v22 = vld [vmem:[%s0 + $0x30] sm:$0xff]
  %v23 = vld [vmem:[%s0 + $0x38] sm:$0xff]
  %v24 = vld [vmem:[%s0 + $0x40] sm:$0xff]
  %v25 = vld [vmem:[%s0 + $0x48] sm:$0xff]
  %v26 = vld [vmem:[%s0 + $0x50] sm:$0xff]
  %v27 = vld [vmem:[%s0 + $0x58] sm:$0xff]
  %v28 = vld [vmem:[%s0 + $0x60] sm:$0xff]
  %v29 = vld [vmem:[%s0 + $0x68] sm:$0xff]
  %v30 = vld [vmem:[%s0 + $0x70] sm:$0xff]
  %v31 = vld [vmem:[%s0 + $0x78] sm:$0xff]
  %v32 = vld [vmem:[%s0 + $0x80] sm:$0xff]
  %v33 = vld [vmem:[%s0 + $0x88] sm:$0xff]
  %v34 = vld [vmem:[%s0 + $0x90] sm:$0x33]
  %v35 = vld [vmem:[%s0 + $0x98] sm:$0x33]
  %v56 = vunpack.c.l.b16 %v16
  %v57 = vunpack.c.h.b16 %v16
  %v58 = vunpack.c.l.b16 %v17
  %v59 = vunpack.c.h.b16 %v17
  %v60 = vunpack.c.l.b16 %v18
  %v61 = vunpack.c.h.b16 %v18
  %v62 = vunpack.c.l.b16 %v19
  %v63 = vunpack.c.h.b16 %v19
  %v64 = vunpack.c.l.b16 %v20
  %v65 = vunpack.c.h.b16 %v20
  %v66 = vunpack.c.l.b16 %v21
  %v67 = vunpack.c.h.b16 %v21
  %v68 = vunpack.c.l.b16 %v22
  %v69 = vunpack.c.h.b16 %v22
  %v70 = vunpack.c.l.b16 %v23
  %v71 = vunpack.c.h.b16 %v23
  %v72 = vunpack.c.l.b16 %v24
  %v73 = vunpack.c.h.b16 %v24
  %v74 = vunpack.c.l.b16 %v25
  %v75 = vunpack.c.h.b16 %v25
  %v76 = vunpack.c.l.b16 %v26
  %v77 = vunpack.c.h.b16 %v26
  %v78 = vunpack.c.l.b16 %v27
  %v79 = vunpack.c.h.b16 %v27
  %v80 = vunpack.c.l.b16 %v28
  %v81 = vunpack.c.h.b16 %v28
  %v82 = vunpack.c.l.b16 %v29
  %v83 = vunpack.c.h.b16 %v29
  %v84 = vunpack.c.l.b16 %v30
  %v85 = vunpack.c.h.b16 %v30
  %v86 = vunpack.c.l.b16 %v31
  %v87 = vunpack.c.h.b16 %v31
  %v88 = vunpack.c.l.b16 %v32
  %v89 = vunpack.c.h.b16 %v32
  %v90 = vunpack.c.l.b16 %v33
  %v91 = vunpack.c.h.b16 %v33
  %v92 = vunpack.c.l.b16 %v34
  %v93 = vunpack.c.h.b16 %v34
  %v94 = vunpack.c.l.b16 %v35
  %v95 = vunpack.c.h.b16 %v35
  %v96 = vpack.c.b16 %v60, %v56
  %v97 = vpack.c.b16 %v61, %v57
  %v98 = vpack.c.b16 %v62, %v58
  %v99 = vpack.c.b16 %v63, %v59
  %v100 = vpack.c.b16 %v68, %v64
  %v101 = vpack.c.b16 %v69, %v65
  %v102 = vpack.c.b16 %v70, %v66
  %v103 = vpack.c.b16 %v71, %v67
  %v104 = vpack.c.b16 %v76, %v72
  %v105 = vpack.c.b16 %v77, %v73
  %v106 = vpack.c.b16 %v78, %v74
  %v107 = vpack.c.b16 %v79, %v75
  %v108 = vpack.c.b16 %v84, %v80
  %v109 = vpack.c.b16 %v85, %v81
  %v110 = vpack.c.b16 %v86, %v82
  %v111 = vpack.c.b16 %v87, %v83
  %v112 = vpack.c.b16 %v92, %v88
  %v113 = vpack.c.b16 %v93, %v89
  %v114 = vpack.c.b16 %v94, %v90
  %v115 = vpack.c.b16 %v95, %v91
  %vm132 = vcmask 613376
  %v134 = vsel %vm132, %v15, 0
  %vm136 = vcmask 1044480
  %vm137 = vcmask 1045504
  %v138 = vsel %vm136, 4294967295, 65535
  %v139 = vsel %vm137, %v138, 0
  %v141 = vand.u32 %v112, %v139
  %v144 = vand.u32 %v113, %v139
  %v147 = vand.u32 %v114, %v139
  %v150 = vand.u32 %v115, %v139
  %152 = vmatpush.bf16.msra.mxu0 0
  %153 = vmatpush.bf16.msra.mxu0 0
  %154 = vmatpush.bf16.msra.mxu0 0
  %155 = vmatpush.bf16.msra.mxu0 %v141
  %156 = vmatpush.bf16.msra.mxu0 %v108
  %157 = vmatpush.bf16.msra.mxu0 %v104
  %158 = vmatpush.bf16.msra.mxu0 %v100
  %159 = vmatpush.bf16.msra.mxu0 %v96
  %160 = vmatmul.bf16.gmra.mxu0 %v134
  %v161 = vpop.f32.mrf.mxu0
  %v162 = vadd.f32 0.0, %v161
  %v163 = vpop.f32.mrf.mxu0
  %164 = vdwg.mxu0
  %165 = vmatpush.bf16.msra.mxu0 0
  %166 = vmatpush.bf16.msra.mxu0 0
  %167 = vmatpush.bf16.msra.mxu0 0
  %168 = vmatpush.bf16.msra.mxu0 %v144
  %169 = vmatpush.bf16.msra.mxu0 %v109
  %170 = vmatpush.bf16.msra.mxu0 %v105
  %171 = vmatpush.bf16.msra.mxu0 %v101
  %172 = vmatpush.bf16.msra.mxu0 %v97
  %173 = vmatmul.bf16.gmra.mxu0 %v134
  %v174 = vpop.f32.mrf.mxu0
  %v175 = vadd.f32 0.0, %v174
  %v176 = vpop.f32.mrf.mxu0
  %177 = vdwg.mxu0
  %178 = vmatpush.bf16.msra.mxu0 0
  %179 = vmatpush.bf16.msra.mxu0 0
  %180 = vmatpush.bf16.msra.mxu0 0
  %181 = vmatpush.bf16.msra.mxu0 %v147
  %182 = vmatpush.bf16.msra.mxu0 %v110
  %183 = vmatpush.bf16.msra.mxu0 %v106
  %184 = vmatpush.bf16.msra.mxu0 %v102
  %185 = vmatpush.bf16.msra.mxu0 %v98
  %186 = vmatmul.bf16.gmra.mxu0 %v134
  %v187 = vpop.f32.mrf.mxu0
  %v188 = vadd.f32 0.0, %v187
  %v189 = vpop.f32.mrf.mxu0
  %190 = vdwg.mxu0
  %191 = vmatpush.bf16.msra.mxu0 0
  %192 = vmatpush.bf16.msra.mxu0 0
  %193 = vmatpush.bf16.msra.mxu0 0
  %194 = vmatpush.bf16.msra.mxu0 %v150
  %195 = vmatpush.bf16.msra.mxu0 %v111
  %196 = vmatpush.bf16.msra.mxu0 %v107
  %197 = vmatpush.bf16.msra.mxu0 %v103
  %198 = vmatpush.bf16.msra.mxu0 %v99
  %199 = vmatmul.bf16.gmra.mxu0 %v134
  %v200 = vpop.f32.mrf.mxu0
  %v201 = vadd.f32 0.0, %v200
  %v202 = vpop.f32.mrf.mxu0
  %203 = vdwg.mxu0
  %s204 = scalar_lea.vmem %s0, 160
  %v205 = vld [vmem:[%s204] sm:$0xff]
  %v206 = vld [vmem:[%s204 + $0x8] sm:$0xff]
  %v207 = vld [vmem:[%s204 + $0x10] sm:$0xff]
  %v208 = vld [vmem:[%s204 + $0x18] sm:$0xff]
  %v209 = vld [vmem:[%s204 + $0x20] sm:$0xff]
  %v210 = vld [vmem:[%s204 + $0x28] sm:$0xff]
  %v211 = vld [vmem:[%s204 + $0x30] sm:$0xff]
  %v212 = vld [vmem:[%s204 + $0x38] sm:$0xff]
  %v213 = vld [vmem:[%s204 + $0x40] sm:$0xff]
  %v214 = vld [vmem:[%s204 + $0x48] sm:$0xff]
  %v215 = vld [vmem:[%s204 + $0x50] sm:$0xff]
  %v216 = vld [vmem:[%s204 + $0x58] sm:$0xff]
  %v217 = vld [vmem:[%s204 + $0x60] sm:$0xff]
  %v218 = vld [vmem:[%s204 + $0x68] sm:$0xff]
  %v219 = vld [vmem:[%s204 + $0x70] sm:$0xff]
  %v220 = vld [vmem:[%s204 + $0x78] sm:$0xff]
  %v221 = vld [vmem:[%s204 + $0x80] sm:$0xff]
  %v222 = vld [vmem:[%s204 + $0x88] sm:$0xff]
  %v223 = vld [vmem:[%s204 + $0x90] sm:$0x33]
  %v224 = vld [vmem:[%s204 + $0x98] sm:$0x33]
  %v245 = vunpack.c.l.b16 %v205
  %v246 = vunpack.c.h.b16 %v205
  %v247 = vunpack.c.l.b16 %v206
  %v248 = vunpack.c.h.b16 %v206
  %v249 = vunpack.c.l.b16 %v207
  %v250 = vunpack.c.h.b16 %v207
  %v251 = vunpack.c.l.b16 %v208
  %v252 = vunpack.c.h.b16 %v208
  %v253 = vunpack.c.l.b16 %v209
  %v254 = vunpack.c.h.b16 %v209
  %v255 = vunpack.c.l.b16 %v210
  %v256 = vunpack.c.h.b16 %v210
  %v257 = vunpack.c.l.b16 %v211
  %v258 = vunpack.c.h.b16 %v211
  %v259 = vunpack.c.l.b16 %v212
  %v260 = vunpack.c.h.b16 %v212
  %v261 = vunpack.c.l.b16 %v213
  %v262 = vunpack.c.h.b16 %v213
  %v263 = vunpack.c.l.b16 %v214
  %v264 = vunpack.c.h.b16 %v214
  %v265 = vunpack.c.l.b16 %v215
  %v266 = vunpack.c.h.b16 %v215
  %v267 = vunpack.c.l.b16 %v216
  %v268 = vunpack.c.h.b16 %v216
  %v269 = vunpack.c.l.b16 %v217
  %v270 = vunpack.c.h.b16 %v217
  %v271 = vunpack.c.l.b16 %v218
  %v272 = vunpack.c.h.b16 %v218
  %v273 = vunpack.c.l.b16 %v219
  %v274 = vunpack.c.h.b16 %v219
  %v275 = vunpack.c.l.b16 %v220
  %v276 = vunpack.c.h.b16 %v220
  %v277 = vunpack.c.l.b16 %v221
  %v278 = vunpack.c.h.b16 %v221
  %v279 = vunpack.c.l.b16 %v222
  %v280 = vunpack.c.h.b16 %v222
  %v281 = vunpack.c.l.b16 %v223
  %v282 = vunpack.c.h.b16 %v223
  %v283 = vunpack.c.l.b16 %v224
  %v284 = vunpack.c.h.b16 %v224
  %v285 = vpack.c.b16 %v249, %v245
  %v286 = vpack.c.b16 %v250, %v246
  %v287 = vpack.c.b16 %v251, %v247
  %v288 = vpack.c.b16 %v252, %v248
  %v289 = vpack.c.b16 %v257, %v253
  %v290 = vpack.c.b16 %v258, %v254
  %v291 = vpack.c.b16 %v259, %v255
  %v292 = vpack.c.b16 %v260, %v256
  %v293 = vpack.c.b16 %v265, %v261
  %v294 = vpack.c.b16 %v266, %v262
  %v295 = vpack.c.b16 %v267, %v263
  %v296 = vpack.c.b16 %v268, %v264
  %v297 = vpack.c.b16 %v273, %v269
  %v298 = vpack.c.b16 %v274, %v270
  %v299 = vpack.c.b16 %v275, %v271
  %v300 = vpack.c.b16 %v276, %v272
  %v301 = vpack.c.b16 %v281, %v277
  %v302 = vpack.c.b16 %v282, %v278
  %v303 = vpack.c.b16 %v283, %v279
  %v304 = vpack.c.b16 %v284, %v280
  %v322 = vand.u32 %v301, %v139
  %v325 = vand.u32 %v302, %v139
  %v328 = vand.u32 %v303, %v139
  %v331 = vand.u32 %v304, %v139
  %333 = vmatpush.bf16.msra.mxu0 0
  %334 = vmatpush.bf16.msra.mxu0 0
  %335 = vmatpush.bf16.msra.mxu0 0
  %336 = vmatpush.bf16.msra.mxu0 %v322
  %337 = vmatpush.bf16.msra.mxu0 %v297
  %338 = vmatpush.bf16.msra.mxu0 %v293
  %339 = vmatpush.bf16.msra.mxu0 %v289
  %340 = vmatpush.bf16.msra.mxu0 %v285
  %341 = vmatmul.bf16.gmra.mxu0 %v134
  %v342 = vpop.f32.mrf.mxu0
  %v343 = vadd.f32 0.0, %v342
  %v344 = vpop.f32.mrf.mxu0
  %345 = vdwg.mxu0
  %346 = vmatpush.bf16.msra.mxu0 0
  %347 = vmatpush.bf16.msra.mxu0 0
  %348 = vmatpush.bf16.msra.mxu0 0
  %349 = vmatpush.bf16.msra.mxu0 %v325
  %350 = vmatpush.bf16.msra.mxu0 %v298
  %351 = vmatpush.bf16.msra.mxu0 %v294
  %352 = vmatpush.bf16.msra.mxu0 %v290
  %353 = vmatpush.bf16.msra.mxu0 %v286
  %354 = vmatmul.bf16.gmra.mxu0 %v134
  %v355 = vpop.f32.mrf.mxu0
  %v356 = vadd.f32 0.0, %v355
  %v357 = vpop.f32.mrf.mxu0
  %358 = vdwg.mxu0
  %359 = vmatpush.bf16.msra.mxu0 0
  %360 = vmatpush.bf16.msra.mxu0 0
  %361 = vmatpush.bf16.msra.mxu0 0
  %362 = vmatpush.bf16.msra.mxu0 %v328
  %363 = vmatpush.bf16.msra.mxu0 %v299
  %364 = vmatpush.bf16.msra.mxu0 %v295
  %365 = vmatpush.bf16.msra.mxu0 %v291
  %366 = vmatpush.bf16.msra.mxu0 %v287
  %367 = vmatmul.bf16.gmra.mxu0 %v134
  %v368 = vpop.f32.mrf.mxu0
  %v369 = vadd.f32 0.0, %v368
  %v370 = vpop.f32.mrf.mxu0
  %371 = vdwg.mxu0
  %372 = vmatpush.bf16.msra.mxu0 0
  %373 = vmatpush.bf16.msra.mxu0 0
  %374 = vmatpush.bf16.msra.mxu0 0
  %375 = vmatpush.bf16.msra.mxu0 %v331
  %376 = vmatpush.bf16.msra.mxu0 %v300
  %377 = vmatpush.bf16.msra.mxu0 %v296
  %378 = vmatpush.bf16.msra.mxu0 %v292
  %379 = vmatpush.bf16.msra.mxu0 %v288
  %380 = vmatmul.bf16.gmra.mxu0 %v134
  %v381 = vpop.f32.mrf.mxu0
  %v382 = vadd.f32 0.0, %v381
  %v383 = vpop.f32.mrf.mxu0
  %384 = vdwg.mxu0
  %s385 = scalar_lea.vmem %s0, 320
  %v386 = vld [vmem:[%s385] sm:$0xff]
  %v387 = vld [vmem:[%s385 + $0x8] sm:$0xff]
  %v388 = vld [vmem:[%s385 + $0x10] sm:$0xff]
  %v389 = vld [vmem:[%s385 + $0x18] sm:$0xff]
  %v390 = vld [vmem:[%s385 + $0x20] sm:$0xff]
  %v391 = vld [vmem:[%s385 + $0x28] sm:$0xff]
  %v392 = vld [vmem:[%s385 + $0x30] sm:$0xff]
  %v393 = vld [vmem:[%s385 + $0x38] sm:$0xff]
  %v394 = vld [vmem:[%s385 + $0x40] sm:$0xff]
  %v395 = vld [vmem:[%s385 + $0x48] sm:$0xff]
  %v396 = vld [vmem:[%s385 + $0x50] sm:$0xff]
  %v397 = vld [vmem:[%s385 + $0x58] sm:$0xff]
  %v398 = vld [vmem:[%s385 + $0x60] sm:$0xff]
  %v399 = vld [vmem:[%s385 + $0x68] sm:$0xff]
  %v400 = vld [vmem:[%s385 + $0x70] sm:$0xff]
  %v401 = vld [vmem:[%s385 + $0x78] sm:$0xff]
  %v402 = vld [vmem:[%s385 + $0x80] sm:$0xff]
  %v403 = vld [vmem:[%s385 + $0x88] sm:$0xff]
  %v404 = vld [vmem:[%s385 + $0x90] sm:$0x33]
  %v405 = vld [vmem:[%s385 + $0x98] sm:$0x33]
  %v426 = vunpack.c.l.b16 %v386
  %v427 = vunpack.c.h.b16 %v386
  %v428 = vunpack.c.l.b16 %v387
  %v429 = vunpack.c.h.b16 %v387
  %v430 = vunpack.c.l.b16 %v388
  %v431 = vunpack.c.h.b16 %v388
  %v432 = vunpack.c.l.b16 %v389
  %v433 = vunpack.c.h.b16 %v389
  %v434 = vunpack.c.l.b16 %v390
  %v435 = vunpack.c.h.b16 %v390
  %v436 = vunpack.c.l.b16 %v391
  %v437 = vunpack.c.h.b16 %v391
  %v438 = vunpack.c.l.b16 %v392
  %v439 = vunpack.c.h.b16 %v392
  %v440 = vunpack.c.l.b16 %v393
  %v441 = vunpack.c.h.b16 %v393
  %v442 = vunpack.c.l.b16 %v394
  %v443 = vunpack.c.h.b16 %v394
  %v444 = vunpack.c.l.b16 %v395
  %v445 = vunpack.c.h.b16 %v395
  %v446 = vunpack.c.l.b16 %v396
  %v447 = vunpack.c.h.b16 %v396
  %v448 = vunpack.c.l.b16 %v397
  %v449 = vunpack.c.h.b16 %v397
  %v450 = vunpack.c.l.b16 %v398
  %v451 = vunpack.c.h.b16 %v398
  %v452 = vunpack.c.l.b16 %v399
  %v453 = vunpack.c.h.b16 %v399
  %v454 = vunpack.c.l.b16 %v400
  %v455 = vunpack.c.h.b16 %v400
  %v456 = vunpack.c.l.b16 %v401
  %v457 = vunpack.c.h.b16 %v401
  %v458 = vunpack.c.l.b16 %v402
  %v459 = vunpack.c.h.b16 %v402
  %v460 = vunpack.c.l.b16 %v403
  %v461 = vunpack.c.h.b16 %v403
  %v462 = vunpack.c.l.b16 %v404
  %v463 = vunpack.c.h.b16 %v404
  %v464 = vunpack.c.l.b16 %v405
  %v465 = vunpack.c.h.b16 %v405
  %v466 = vpack.c.b16 %v430, %v426
  %v467 = vpack.c.b16 %v431, %v427
  %v468 = vpack.c.b16 %v432, %v428
  %v469 = vpack.c.b16 %v433, %v429
  %v470 = vpack.c.b16 %v438, %v434
  %v471 = vpack.c.b16 %v439, %v435
  %v472 = vpack.c.b16 %v440, %v436
  %v473 = vpack.c.b16 %v441, %v437
  %v474 = vpack.c.b16 %v446, %v442
  %v475 = vpack.c.b16 %v447, %v443
  %v476 = vpack.c.b16 %v448, %v444
  %v477 = vpack.c.b16 %v449, %v445
  %v478 = vpack.c.b16 %v454, %v450
  %v479 = vpack.c.b16 %v455, %v451
  %v480 = vpack.c.b16 %v456, %v452
  %v481 = vpack.c.b16 %v457, %v453
  %v482 = vpack.c.b16 %v462, %v458
  %v483 = vpack.c.b16 %v463, %v459
  %v484 = vpack.c.b16 %v464, %v460
  %v485 = vpack.c.b16 %v465, %v461
  %v503 = vand.u32 %v482, %v139
  %v506 = vand.u32 %v483, %v139
  %v509 = vand.u32 %v484, %v139
  %v512 = vand.u32 %v485, %v139
  %514 = vmatpush.bf16.msra.mxu0 0
  %515 = vmatpush.bf16.msra.mxu0 0
  %516 = vmatpush.bf16.msra.mxu0 0
  %517 = vmatpush.bf16.msra.mxu0 %v503
  %518 = vmatpush.bf16.msra.mxu0 %v478
  %519 = vmatpush.bf16.msra.mxu0 %v474
  %520 = vmatpush.bf16.msra.mxu0 %v470
  %521 = vmatpush.bf16.msra.mxu0 %v466
  %522 = vmatmul.bf16.gmra.mxu0 %v134
  %v523 = vpop.f32.mrf.mxu0
  %v524 = vadd.f32 0.0, %v523
  %v525 = vpop.f32.mrf.mxu0
  %526 = vdwg.mxu0
  %527 = vmatpush.bf16.msra.mxu0 0
  %528 = vmatpush.bf16.msra.mxu0 0
  %529 = vmatpush.bf16.msra.mxu0 0
  %530 = vmatpush.bf16.msra.mxu0 %v506
  %531 = vmatpush.bf16.msra.mxu0 %v479
  %532 = vmatpush.bf16.msra.mxu0 %v475
  %533 = vmatpush.bf16.msra.mxu0 %v471
  %534 = vmatpush.bf16.msra.mxu0 %v467
  %535 = vmatmul.bf16.gmra.mxu0 %v134
  %v536 = vpop.f32.mrf.mxu0
  %v537 = vadd.f32 0.0, %v536
  %v538 = vpop.f32.mrf.mxu0
  %539 = vdwg.mxu0
  %540 = vmatpush.bf16.msra.mxu0 0
  %541 = vmatpush.bf16.msra.mxu0 0
  %542 = vmatpush.bf16.msra.mxu0 0
  %543 = vmatpush.bf16.msra.mxu0 %v509
  %544 = vmatpush.bf16.msra.mxu0 %v480
  %545 = vmatpush.bf16.msra.mxu0 %v476
  %546 = vmatpush.bf16.msra.mxu0 %v472
  %547 = vmatpush.bf16.msra.mxu0 %v468
  %548 = vmatmul.bf16.gmra.mxu0 %v134
  %v549 = vpop.f32.mrf.mxu0
  %v550 = vadd.f32 0.0, %v549
  %v551 = vpop.f32.mrf.mxu0
  %552 = vdwg.mxu0
  %553 = vmatpush.bf16.msra.mxu0 0
  %554 = vmatpush.bf16.msra.mxu0 0
  %555 = vmatpush.bf16.msra.mxu0 0
  %556 = vmatpush.bf16.msra.mxu0 %v512
  %557 = vmatpush.bf16.msra.mxu0 %v481
  %558 = vmatpush.bf16.msra.mxu0 %v477
  %559 = vmatpush.bf16.msra.mxu0 %v473
  %560 = vmatpush.bf16.msra.mxu0 %v469
  %561 = vmatmul.bf16.gmra.mxu0 %v134
  %v562 = vpop.f32.mrf.mxu0
  %v563 = vadd.f32 0.0, %v562
  %v564 = vpop.f32.mrf.mxu0
  %565 = vdwg.mxu0
  %s566 = scalar_lea.vmem %s0, 480
  %v567 = vld [vmem:[%s566] sm:$0xff]
  %v568 = vld [vmem:[%s566 + $0x8] sm:$0xff]
  %v569 = vld [vmem:[%s566 + $0x10] sm:$0xff]
  %v570 = vld [vmem:[%s566 + $0x18] sm:$0xff]
  %v571 = vld [vmem:[%s566 + $0x20] sm:$0xff]
  %v572 = vld [vmem:[%s566 + $0x28] sm:$0xff]
  %v573 = vld [vmem:[%s566 + $0x30] sm:$0xff]
  %v574 = vld [vmem:[%s566 + $0x38] sm:$0xff]
  %v575 = vld [vmem:[%s566 + $0x40] sm:$0xff]
  %v576 = vld [vmem:[%s566 + $0x48] sm:$0xff]
  %v577 = vld [vmem:[%s566 + $0x50] sm:$0xff]
  %v578 = vld [vmem:[%s566 + $0x58] sm:$0xff]
  %v579 = vld [vmem:[%s566 + $0x60] sm:$0xff]
  %v580 = vld [vmem:[%s566 + $0x68] sm:$0xff]
  %v581 = vld [vmem:[%s566 + $0x70] sm:$0xff]
  %v582 = vld [vmem:[%s566 + $0x78] sm:$0xff]
  %v583 = vld [vmem:[%s566 + $0x80] sm:$0xff]
  %v584 = vld [vmem:[%s566 + $0x88] sm:$0xff]
  %v585 = vld [vmem:[%s566 + $0x90] sm:$0x33]
  %v586 = vld [vmem:[%s566 + $0x98] sm:$0x33]
  %v607 = vunpack.c.l.b16 %v567
  %v608 = vunpack.c.h.b16 %v567
  %v609 = vunpack.c.l.b16 %v568
  %v610 = vunpack.c.h.b16 %v568
  %v611 = vunpack.c.l.b16 %v569
  %v612 = vunpack.c.h.b16 %v569
  %v613 = vunpack.c.l.b16 %v570
  %v614 = vunpack.c.h.b16 %v570
  %v615 = vunpack.c.l.b16 %v571
  %v616 = vunpack.c.h.b16 %v571
  %v617 = vunpack.c.l.b16 %v572
  %v618 = vunpack.c.h.b16 %v572
  %v619 = vunpack.c.l.b16 %v573
  %v620 = vunpack.c.h.b16 %v573
  %v621 = vunpack.c.l.b16 %v574
  %v622 = vunpack.c.h.b16 %v574
  %v623 = vunpack.c.l.b16 %v575
  %v624 = vunpack.c.h.b16 %v575
  %v625 = vunpack.c.l.b16 %v576
  %v626 = vunpack.c.h.b16 %v576
  %v627 = vunpack.c.l.b16 %v577
  %v628 = vunpack.c.h.b16 %v577
  %v629 = vunpack.c.l.b16 %v578
  %v630 = vunpack.c.h.b16 %v578
  %v631 = vunpack.c.l.b16 %v579
  %v632 = vunpack.c.h.b16 %v579
  %v633 = vunpack.c.l.b16 %v580
  %v634 = vunpack.c.h.b16 %v580
  %v635 = vunpack.c.l.b16 %v581
  %v636 = vunpack.c.h.b16 %v581
  %v637 = vunpack.c.l.b16 %v582
  %v638 = vunpack.c.h.b16 %v582
  %v639 = vunpack.c.l.b16 %v583
  %v640 = vunpack.c.h.b16 %v583
  %v641 = vunpack.c.l.b16 %v584
  %v642 = vunpack.c.h.b16 %v584
  %v643 = vunpack.c.l.b16 %v585
  %v644 = vunpack.c.h.b16 %v585
  %v645 = vunpack.c.l.b16 %v586
  %v646 = vunpack.c.h.b16 %v586
  %v647 = vpack.c.b16 %v611, %v607
  %v648 = vpack.c.b16 %v612, %v608
  %v649 = vpack.c.b16 %v613, %v609
  %v650 = vpack.c.b16 %v614, %v610
  %v651 = vpack.c.b16 %v619, %v615
  %v652 = vpack.c.b16 %v620, %v616
  %v653 = vpack.c.b16 %v621, %v617
  %v654 = vpack.c.b16 %v622, %v618
  %v655 = vpack.c.b16 %v627, %v623
  %v656 = vpack.c.b16 %v628, %v624
  %v657 = vpack.c.b16 %v629, %v625
  %v658 = vpack.c.b16 %v630, %v626
  %v659 = vpack.c.b16 %v635, %v631
  %v660 = vpack.c.b16 %v636, %v632
  %v661 = vpack.c.b16 %v637, %v633
  %v662 = vpack.c.b16 %v638, %v634
  %v663 = vpack.c.b16 %v643, %v639
  %v664 = vpack.c.b16 %v644, %v640
  %v665 = vpack.c.b16 %v645, %v641
  %v666 = vpack.c.b16 %v646, %v642
  %v684 = vand.u32 %v663, %v139
  %v687 = vand.u32 %v664, %v139
  %v690 = vand.u32 %v665, %v139
  %v693 = vand.u32 %v666, %v139
  %695 = vmatpush.bf16.msra.mxu0 0
  %696 = vmatpush.bf16.msra.mxu0 0
  %697 = vmatpush.bf16.msra.mxu0 0
  %698 = vmatpush.bf16.msra.mxu0 %v684
  %699 = vmatpush.bf16.msra.mxu0 %v659
  %700 = vmatpush.bf16.msra.mxu0 %v655
  %701 = vmatpush.bf16.msra.mxu0 %v651
  %702 = vmatpush.bf16.msra.mxu0 %v647
  %703 = vmatmul.bf16.gmra.mxu0 %v134
  %v704 = vpop.f32.mrf.mxu0
  %v705 = vadd.f32 0.0, %v704
  %v706 = vpop.f32.mrf.mxu0
  %707 = vdwg.mxu0
  %708 = vmatpush.bf16.msra.mxu0 0
  %709 = vmatpush.bf16.msra.mxu0 0
  %710 = vmatpush.bf16.msra.mxu0 0
  %711 = vmatpush.bf16.msra.mxu0 %v687
  %712 = vmatpush.bf16.msra.mxu0 %v660
  %713 = vmatpush.bf16.msra.mxu0 %v656
  %714 = vmatpush.bf16.msra.mxu0 %v652
  %715 = vmatpush.bf16.msra.mxu0 %v648
  %716 = vmatmul.bf16.gmra.mxu0 %v134
  %v717 = vpop.f32.mrf.mxu0
  %v718 = vadd.f32 0.0, %v717
  %v719 = vpop.f32.mrf.mxu0
  %720 = vdwg.mxu0
  %721 = vmatpush.bf16.msra.mxu0 0
  %722 = vmatpush.bf16.msra.mxu0 0
  %723 = vmatpush.bf16.msra.mxu0 0
  %724 = vmatpush.bf16.msra.mxu0 %v690
  %725 = vmatpush.bf16.msra.mxu0 %v661
  %726 = vmatpush.bf16.msra.mxu0 %v657
  %727 = vmatpush.bf16.msra.mxu0 %v653
  %728 = vmatpush.bf16.msra.mxu0 %v649
  %729 = vmatmul.bf16.gmra.mxu0 %v134
  %v730 = vpop.f32.mrf.mxu0
  %v731 = vadd.f32 0.0, %v730
  %v732 = vpop.f32.mrf.mxu0
  %733 = vdwg.mxu0
  %734 = vmatpush.bf16.msra.mxu0 0
  %735 = vmatpush.bf16.msra.mxu0 0
  %736 = vmatpush.bf16.msra.mxu0 0
  %737 = vmatpush.bf16.msra.mxu0 %v693
  %738 = vmatpush.bf16.msra.mxu0 %v662
  %739 = vmatpush.bf16.msra.mxu0 %v658
  %740 = vmatpush.bf16.msra.mxu0 %v654
  %741 = vmatpush.bf16.msra.mxu0 %v650
  %742 = vmatmul.bf16.gmra.mxu0 %v134
  %v743 = vpop.f32.mrf.mxu0
  %v744 = vadd.f32 0.0, %v743
  %v745 = vpop.f32.mrf.mxu0
  %746 = vdwg.mxu0
  %v747 = vmax.f32 %v162, %v343
  %v748 = vmax.f32 %v175, %v356
  %v749 = vmax.f32 %v188, %v369
  %v750 = vmax.f32 %v201, %v382
  %v751 = vmax.f32 %v524, %v705
  %v752 = vmax.f32 %v537, %v718
  %v753 = vmax.f32 %v550, %v731
  %v754 = vmax.f32 %v563, %v744
  %v755 = vmax.f32 %v747, %v751
  %v756 = vmax.f32 %v748, %v752
  %v757 = vmax.f32 %v749, %v753
  %v758 = vmax.f32 %v750, %v754
  %v759 = vld [vmem:[%s2] sm:$0x3f]
  %761 = vset.pattern.permute.xlu0 0
  %762 = vperm.xlu0 %761, %v759
  %v763 = vpop.permute.xlu0 %762
  %v765 = vadd.f32 %v755, %v763
  %v766 = vadd.f32 %v756, %v763
  %v767 = vadd.f32 %v757, %v763
  %v768 = vadd.f32 %v758, %v763
  %v769 = vmax.f32 %v765, 0.0
  %v770 = vmax.f32 %v766, 0.0
  %v771 = vmax.f32 %v767, 0.0
  %v772 = vmax.f32 %v768, 0.0
  %773 = vst [vmem:[%s3] sm:$0x3f] %v769
  %774 = vst [vmem:[%s3 + $0x8] sm:$0x3f] %v770
  %775 = vst [vmem:[%s3 + $0x10] sm:$0x3f] %v771
  %vm776 = vcmask 62464
  %777 = vst.msk [vmem:[%s3 + $0x18] sm:$0x3f] %vm776, %v772
  // Predicated region
  $region14: #{lenet_forward.3} parent=0 // pred_check
    _
  $region15: #{lenet_forward.3} parent=0 // pred_check_branch
    %779 = sbr.rel (0) target = $region17
  $region16: #{lenet_forward.3} parent=0 // pred_region
    _
  $region17: #{lenet_forward.3} parent=0 // pred_fallthru
    _
  // Predicated region
  $region18: #{lenet_forward.3} parent=0 // pred_check
    _
  $region19: #{lenet_forward.3} parent=0 // pred_check_branch
    %781 = sbr.rel (0) target = $region21
  $region20: #{lenet_forward.3} parent=0 // pred_region
    _
  $region21: #{lenet_forward.3} parent=0 // pred_fallthru
    _

// kernel: lenet_forward.4
$region0: #{lenet_forward.4}
  #allocation0 [shape = 'u32[]', space=smem, size = 0x4, offset = 0x4, fixed_abs, tag = 'smem constant byte address 0x4 - core index']
  #allocation1 [shape = 'u32[72,128]{1,0:T(1,128)}', space=vmem, size = 0x9000, scoped, tag = 'internal scratch']
  %s0 = inlined_call_operand.vmem [shape: bf16[4,150,50], index: 0, kind: input, shape index: {}]
  %s1 = inlined_call_operand.vmem [shape: bf16[16,150], index: 1, kind: input, shape index: {}]
  %s2 = inlined_call_operand.vmem [shape: f32[16,1], index: 2, kind: input, shape index: {}]
  %s3 = inlined_call_operand.vmem [shape: f32[16,50], index: 3, kind: output, shape index: {}]
  %s4 = sld [smem:[#allocation0]]
  $region22: #{lenet_forward.4} parent=0
    _
  %s6 = ssub.s32 1, %s4
  %s7 = scalar_select 0, %s6, %s4
  // Predicated region
  $region2: #{lenet_forward.4} parent=0 // pred_check
    _
  $region3: #{lenet_forward.4} parent=0 // pred_check_branch
    %9 = sbr.rel (0) target = $region5
  $region4: #{lenet_forward.4} parent=0 // pred_region
    _
  $region5: #{lenet_forward.4} parent=0 // pred_fallthru
    _
  // Predicated region
  $region6: #{lenet_forward.4} parent=0 // pred_check
    _
  $region7: #{lenet_forward.4} parent=0 // pred_check_branch
    %11 = sbr.rel (0) target = $region9
  $region8: #{lenet_forward.4} parent=0 // pred_region
    _
  $region9: #{lenet_forward.4} parent=0 // pred_fallthru
    _
  // Predicated region
  $region10: #{lenet_forward.4} parent=0 // pred_check
    _
  $region11: #{lenet_forward.4} parent=0 // pred_check_branch
    %13 = sbr.rel (0) target = $region13
  $region12: #{lenet_forward.4} parent=0 // pred_region
    _
  $region13: #{lenet_forward.4} parent=0 // pred_fallthru
    _
  %v15 = vld [vmem:[%s1] sm:$0xff]
  %v16 = vld [vmem:[%s1 + $0x8] sm:$0xff]
  %v17 = vld [vmem:[%s0] sm:$0xf]
  %v18 = vld [vmem:[%s0 + $0x4] sm:$0xf]
  %v19 = vld [vmem:[%s0 + $0x8] sm:$0xf]
  %v20 = vld [vmem:[%s0 + $0xc] sm:$0xf]
  %v21 = vld [vmem:[%s0 + $0x10] sm:$0xf]
  %v22 = vld [vmem:[%s0 + $0x14] sm:$0xf]
  %v23 = vld [vmem:[%s0 + $0x18] sm:$0xf]
  %v24 = vld [vmem:[%s0 + $0x1c] sm:$0xf]
  %v25 = vld [vmem:[%s0 + $0x20] sm:$0xf]
  %v26 = vld [vmem:[%s0 + $0x24] sm:$0xf]
  %v27 = vld [vmem:[%s0 + $0x28] sm:$0xf]
  %v28 = vld [vmem:[%s0 + $0x2c] sm:$0xf]
  %v29 = vld [vmem:[%s0 + $0x30] sm:$0xf]
  %v30 = vld [vmem:[%s0 + $0x34] sm:$0xf]
  %v31 = vld [vmem:[%s0 + $0x38] sm:$0xf]
  %v32 = vld [vmem:[%s0 + $0x3c] sm:$0xf]
  %v33 = vld [vmem:[%s0 + $0x40] sm:$0xf]
  %v34 = vld [vmem:[%s0 + $0x44] sm:$0xf]
  %v35 = vld [vmem:[%s0 + $0x48] sm:$0x7]
  %v38 = vunpack.c.l.b16 %v15
  %v39 = vunpack.c.h.b16 %v15
  %v40 = vunpack.c.l.b16 %v16
  %v41 = vunpack.c.h.b16 %v16
  %v42 = vpack.c.b16 %v40, %v38
  %v43 = vpack.c.b16 %v41, %v39
  %v64 = vunpack.c.l.b16 %v17
  %v65 = vunpack.c.l.b16 %v18
  %v66 = vunpack.c.l.b16 %v19
  %v67 = vunpack.c.l.b16 %v20
  %v68 = vunpack.c.l.b16 %v21
  %v69 = vunpack.c.l.b16 %v22
  %v70 = vunpack.c.l.b16 %v23
  %v71 = vunpack.c.l.b16 %v24
  %v72 = vunpack.c.l.b16 %v25
  %v73 = vunpack.c.l.b16 %v26
  %v74 = vunpack.c.l.b16 %v27
  %v75 = vunpack.c.l.b16 %v28
  %v76 = vunpack.c.l.b16 %v29
  %v77 = vunpack.c.l.b16 %v30
  %v78 = vunpack.c.l.b16 %v31
  %v79 = vunpack.c.l.b16 %v32
  %v80 = vunpack.c.l.b16 %v33
  %v81 = vunpack.c.l.b16 %v34
  %v82 = vunpack.c.l.b16 %v35
  %v83 = vpack.c.b16 %v65, %v64
  %v84 = vpack.c.b16 %v67, %v66
  %v85 = vpack.c.b16 %v69, %v68
  %v86 = vpack.c.b16 %v71, %v70
  %v87 = vpack.c.b16 %v73, %v72
  %v88 = vpack.c.b16 %v75, %v74
  %v89 = vpack.c.b16 %v77, %v76
  %v90 = vpack.c.b16 %v79, %v78
  %v91 = vpack.c.b16 %v81, %v80
  %v92 = vpack.c.b16 %v82, %v82
  %vm102 = vcmask 179200
  %v104 = vsel %vm102, %v43, 0
  %vm106 = vcmask 1042432
  %v108 = vsel %vm106, %v92, 0
  %110 = vmatpush.bf16.msra.mxu0 %v90
  %111 = vmatpush.bf16.msra.mxu0 %v89
  %112 = vmatpush.bf16.msra.mxu0 %v88
  %113 = vmatpush.bf16.msra.mxu0 %v87
  %114 = vmatpush.bf16.msra.mxu0 %v86
  %115 = vmatpush.bf16.msra.mxu0 %v85
  %116 = vmatpush.bf16.msra.mxu0 %v84
  %117 = vmatpush.bf16.msra.mxu0 %v83
  %118 = vmatmul.bf16.gmra.mxu0 %v42
  %v119 = vpop.f32.mrf.mxu0
  %v120 = vadd.f32 0.0, %v119
  %v121 = vpop.f32.mrf.mxu0
  %v122 = vadd.f32 0.0, %v121
  %123 = vdwg.mxu0
  %124 = vmatpush.bf16.msra.mxu0 0
  %125 = vmatpush.bf16.msra.mxu0 0
  %126 = vmatpush.bf16.msra.mxu0 0
  %127 = vmatpush.bf16.msra.mxu0 0
  %128 = vmatpush.bf16.msra.mxu0 0
  %129 = vmatpush.bf16.msra.mxu0 0
  %130 = vmatpush.bf16.msra.mxu0 %v108
  %131 = vmatpush.bf16.msra.mxu0 %v91
  %132 = vmatmul.bf16.gmra.mxu0 %v104
  %v133 = vpop.f32.mrf.mxu0
  %v134 = vadd.f32 %v120, %v133
  %v135 = vpop.f32.mrf.mxu0
  %v136 = vadd.f32 %v122, %v135
  %137 = vdwg.mxu0
  %s138 = scalar_lea.vmem %s0, 76
  %v139 = vld [vmem:[%s138] sm:$0xf]
  %v140 = vld [vmem:[%s138 + $0x4] sm:$0xf]
  %v141 = vld [vmem:[%s138 + $0x8] sm:$0xf]
  %v142 = vld [vmem:[%s138 + $0xc] sm:$0xf]
  %v143 = vld [vmem:[%s138 + $0x10] sm:$0xf]
  %v144 = vld [vmem:[%s138 + $0x14] sm:$0xf]
  %v145 = vld [vmem:[%s138 + $0x18] sm:$0xf]
  %v146 = vld [vmem:[%s138 + $0x1c] sm:$0xf]
  %v147 = vld [vmem:[%s138 + $0x20] sm:$0xf]
  %v148 = vld [vmem:[%s138 + $0x24] sm:$0xf]
  %v149 = vld [vmem:[%s138 + $0x28] sm:$0xf]
  %v150 = vld [vmem:[%s138 + $0x2c] sm:$0xf]
  %v151 = vld [vmem:[%s138 + $0x30] sm:$0xf]
  %v152 = vld [vmem:[%s138 + $0x34] sm:$0xf]
  %v153 = vld [vmem:[%s138 + $0x38] sm:$0xf]
  %v154 = vld [vmem:[%s138 + $0x3c] sm:$0xf]
  %v155 = vld [vmem:[%s138 + $0x40] sm:$0xf]
  %v156 = vld [vmem:[%s138 + $0x44] sm:$0xf]
  %v157 = vld [vmem:[%s138 + $0x48] sm:$0x7]
  %v177 = vunpack.c.l.b16 %v139
  %v178 = vunpack.c.l.b16 %v140
  %v179 = vunpack.c.l.b16 %v141
  %v180 = vunpack.c.l.b16 %v142
  %v181 = vunpack.c.l.b16 %v143
  %v182 = vunpack.c.l.b16 %v144
  %v183 = vunpack.c.l.b16 %v145
  %v184 = vunpack.c.l.b16 %v146
  %v185 = vunpack.c.l.b16 %v147
  %v186 = vunpack.c.l.b16 %v148
  %v187 = vunpack.c.l.b16 %v149
  %v188 = vunpack.c.l.b16 %v150
  %v189 = vunpack.c.l.b16 %v151
  %v190 = vunpack.c.l.b16 %v152
  %v191 = vunpack.c.l.b16 %v153
  %v192 = vunpack.c.l.b16 %v154
  %v193 = vunpack.c.l.b16 %v155
  %v194 = vunpack.c.l.b16 %v156
  %v195 = vunpack.c.l.b16 %v157
  %v196 = vpack.c.b16 %v178, %v177
  %v197 = vpack.c.b16 %v180, %v179
  %v198 = vpack.c.b16 %v182, %v181
  %v199 = vpack.c.b16 %v184, %v183
  %v200 = vpack.c.b16 %v186, %v185
  %v201 = vpack.c.b16 %v188, %v187
  %v202 = vpack.c.b16 %v190, %v189
  %v203 = vpack.c.b16 %v192, %v191
  %v204 = vpack.c.b16 %v194, %v193
  %v205 = vpack.c.b16 %v195, %v195
  %v216 = vsel %vm106, %v205, 0
  %218 = vmatpush.bf16.msra.mxu0 %v203
  %219 = vmatpush.bf16.msra.mxu0 %v202
  %220 = vmatpush.bf16.msra.mxu0 %v201
  %221 = vmatpush.bf16.msra.mxu0 %v200
  %222 = vmatpush.bf16.msra.mxu0 %v199
  %223 = vmatpush.bf16.msra.mxu0 %v198
  %224 = vmatpush.bf16.msra.mxu0 %v197
  %225 = vmatpush.bf16.msra.mxu0 %v196
  %226 = vmatmul.bf16.gmra.mxu0 %v42
  %v227 = vpop.f32.mrf.mxu0
  %v228 = vadd.f32 0.0, %v227
  %v229 = vpop.f32.mrf.mxu0
  %v230 = vadd.f32 0.0, %v229
  %231 = vdwg.mxu0
  %232 = vmatpush.bf16.msra.mxu0 0
  %233 = vmatpush.bf16.msra.mxu0 0
  %234 = vmatpush.bf16.msra.mxu0 0
  %235 = vmatpush.bf16.msra.mxu0 0
  %236 = vmatpush.bf16.msra.mxu0 0
  %237 = vmatpush.bf16.msra.mxu0 0
  %238 = vmatpush.bf16.msra.mxu0 %v216
  %239 = vmatpush.bf16.msra.mxu0 %v204
  %240 = vmatmul.bf16.gmra.mxu0 %v104
  %v241 = vpop.f32.mrf.mxu0
  %v242 = vadd.f32 %v228, %v241
  %v243 = vpop.f32.mrf.mxu0
  %v244 = vadd.f32 %v230, %v243
  %245 = vdwg.mxu0
  %s246 = scalar_lea.vmem %s0, 152
  %v247 = vld [vmem:[%s246] sm:$0xf]
  %v248 = vld [vmem:[%s246 + $0x4] sm:$0xf]
  %v249 = vld [vmem:[%s246 + $0x8] sm:$0xf]
  %v250 = vld [vmem:[%s246 + $0xc] sm:$0xf]
  %v251 = vld [vmem:[%s246 + $0x10] sm:$0xf]
  %v252 = vld [vmem:[%s246 + $0x14] sm:$0xf]
  %v253 = vld [vmem:[%s246 + $0x18] sm:$0xf]
  %v254 = vld [vmem:[%s246 + $0x1c] sm:$0xf]
  %v255 = vld [vmem:[%s246 + $0x20] sm:$0xf]
  %v256 = vld [vmem:[%s246 + $0x24] sm:$0xf]
  %v257 = vld [vmem:[%s246 + $0x28] sm:$0xf]
  %v258 = vld [vmem:[%s246 + $0x2c] sm:$0xf]
  %v259 = vld [vmem:[%s246 + $0x30] sm:$0xf]
  %v260 = vld [vmem:[%s246 + $0x34] sm:$0xf]
  %v261 = vld [vmem:[%s246 + $0x38] sm:$0xf]
  %v262 = vld [vmem:[%s246 + $0x3c] sm:$0xf]
  %v263 = vld [vmem:[%s246 + $0x40] sm:$0xf]
  %v264 = vld [vmem:[%s246 + $0x44] sm:$0xf]
  %v265 = vld [vmem:[%s246 + $0x48] sm:$0x7]
  %v285 = vunpack.c.l.b16 %v247
  %v286 = vunpack.c.l.b16 %v248
  %v287 = vunpack.c.l.b16 %v249
  %v288 = vunpack.c.l.b16 %v250
  %v289 = vunpack.c.l.b16 %v251
  %v290 = vunpack.c.l.b16 %v252
  %v291 = vunpack.c.l.b16 %v253
  %v292 = vunpack.c.l.b16 %v254
  %v293 = vunpack.c.l.b16 %v255
  %v294 = vunpack.c.l.b16 %v256
  %v295 = vunpack.c.l.b16 %v257
  %v296 = vunpack.c.l.b16 %v258
  %v297 = vunpack.c.l.b16 %v259
  %v298 = vunpack.c.l.b16 %v260
  %v299 = vunpack.c.l.b16 %v261
  %v300 = vunpack.c.l.b16 %v262
  %v301 = vunpack.c.l.b16 %v263
  %v302 = vunpack.c.l.b16 %v264
  %v303 = vunpack.c.l.b16 %v265
  %v304 = vpack.c.b16 %v286, %v285
  %v305 = vpack.c.b16 %v288, %v287
  %v306 = vpack.c.b16 %v290, %v289
  %v307 = vpack.c.b16 %v292, %v291
  %v308 = vpack.c.b16 %v294, %v293
  %v309 = vpack.c.b16 %v296, %v295
  %v310 = vpack.c.b16 %v298, %v297
  %v311 = vpack.c.b16 %v300, %v299
  %v312 = vpack.c.b16 %v302, %v301
  %v313 = vpack.c.b16 %v303, %v303
  %v324 = vsel %vm106, %v313, 0
  %326 = vmatpush.bf16.msra.mxu0 %v311
  %327 = vmatpush.bf16.msra.mxu0 %v310
  %328 = vmatpush.bf16.msra.mxu0 %v309
  %329 = vmatpush.bf16.msra.mxu0 %v308
  %330 = vmatpush.bf16.msra.mxu0 %v307
  %331 = vmatpush.bf16.msra.mxu0 %v306
  %332 = vmatpush.bf16.msra.mxu0 %v305
  %333 = vmatpush.bf16.msra.mxu0 %v304
  %334 = vmatmul.bf16.gmra.mxu0 %v42
  %v335 = vpop.f32.mrf.mxu0
  %v336 = vadd.f32 0.0, %v335
  %v337 = vpop.f32.mrf.mxu0
  %v338 = vadd.f32 0.0, %v337
  %339 = vdwg.mxu0
  %340 = vmatpush.bf16.msra.mxu0 0
  %341 = vmatpush.bf16.msra.mxu0 0
  %342 = vmatpush.bf16.msra.mxu0 0
  %343 = vmatpush.bf16.msra.mxu0 0
  %344 = vmatpush.bf16.msra.mxu0 0
  %345 = vmatpush.bf16.msra.mxu0 0
  %346 = vmatpush.bf16.msra.mxu0 %v324
  %347 = vmatpush.bf16.msra.mxu0 %v312
  %348 = vmatmul.bf16.gmra.mxu0 %v104
  %v349 = vpop.f32.mrf.mxu0
  %v350 = vadd.f32 %v336, %v349
  %v351 = vpop.f32.mrf.mxu0
  %v352 = vadd.f32 %v338, %v351
  %353 = vdwg.mxu0
  %s354 = scalar_lea.vmem %s0, 228
  %v355 = vld [vmem:[%s354] sm:$0xf]
  %v356 = vld [vmem:[%s354 + $0x4] sm:$0xf]
  %v357 = vld [vmem:[%s354 + $0x8] sm:$0xf]
  %v358 = vld [vmem:[%s354 + $0xc] sm:$0xf]
  %v359 = vld [vmem:[%s354 + $0x10] sm:$0xf]
  %v360 = vld [vmem:[%s354 + $0x14] sm:$0xf]
  %v361 = vld [vmem:[%s354 + $0x18] sm:$0xf]
  %v362 = vld [vmem:[%s354 + $0x1c] sm:$0xf]
  %v363 = vld [vmem:[%s354 + $0x20] sm:$0xf]
  %v364 = vld [vmem:[%s354 + $0x24] sm:$0xf]
  %v365 = vld [vmem:[%s354 + $0x28] sm:$0xf]
  %v366 = vld [vmem:[%s354 + $0x2c] sm:$0xf]
  %v367 = vld [vmem:[%s354 + $0x30] sm:$0xf]
  %v368 = vld [vmem:[%s354 + $0x34] sm:$0xf]
  %v369 = vld [vmem:[%s354 + $0x38] sm:$0xf]
  %v370 = vld [vmem:[%s354 + $0x3c] sm:$0xf]
  %v371 = vld [vmem:[%s354 + $0x40] sm:$0xf]
  %v372 = vld [vmem:[%s354 + $0x44] sm:$0xf]
  %v373 = vld [vmem:[%s354 + $0x48] sm:$0x7]
  %v393 = vunpack.c.l.b16 %v355
  %v394 = vunpack.c.l.b16 %v356
  %v395 = vunpack.c.l.b16 %v357
  %v396 = vunpack.c.l.b16 %v358
  %v397 = vunpack.c.l.b16 %v359
  %v398 = vunpack.c.l.b16 %v360
  %v399 = vunpack.c.l.b16 %v361
  %v400 = vunpack.c.l.b16 %v362
  %v401 = vunpack.c.l.b16 %v363
  %v402 = vunpack.c.l.b16 %v364
  %v403 = vunpack.c.l.b16 %v365
  %v404 = vunpack.c.l.b16 %v366
  %v405 = vunpack.c.l.b16 %v367
  %v406 = vunpack.c.l.b16 %v368
  %v407 = vunpack.c.l.b16 %v369
  %v408 = vunpack.c.l.b16 %v370
  %v409 = vunpack.c.l.b16 %v371
  %v410 = vunpack.c.l.b16 %v372
  %v411 = vunpack.c.l.b16 %v373
  %v412 = vpack.c.b16 %v394, %v393
  %v413 = vpack.c.b16 %v396, %v395
  %v414 = vpack.c.b16 %v398, %v397
  %v415 = vpack.c.b16 %v400, %v399
  %v416 = vpack.c.b16 %v402, %v401
  %v417 = vpack.c.b16 %v404, %v403
  %v418 = vpack.c.b16 %v406, %v405
  %v419 = vpack.c.b16 %v408, %v407
  %v420 = vpack.c.b16 %v410, %v409
  %v421 = vpack.c.b16 %v411, %v411
  %v432 = vsel %vm106, %v421, 0
  %434 = vmatpush.bf16.msra.mxu0 %v419
  %435 = vmatpush.bf16.msra.mxu0 %v418
  %436 = vmatpush.bf16.msra.mxu0 %v417
  %437 = vmatpush.bf16.msra.mxu0 %v416
  %438 = vmatpush.bf16.msra.mxu0 %v415
  %439 = vmatpush.bf16.msra.mxu0 %v414
  %440 = vmatpush.bf16.msra.mxu0 %v413
  %441 = vmatpush.bf16.msra.mxu0 %v412
  %442 = vmatmul.bf16.gmra.mxu0 %v42
  %v443 = vpop.f32.mrf.mxu0
  %v444 = vadd.f32 0.0, %v443
  %v445 = vpop.f32.mrf.mxu0
  %v446 = vadd.f32 0.0, %v445
  %447 = vdwg.mxu0
  %448 = vmatpush.bf16.msra.mxu0 0
  %449 = vmatpush.bf16.msra.mxu0 0
  %450 = vmatpush.bf16.msra.mxu0 0
  %451 = vmatpush.bf16.msra.mxu0 0
  %452 = vmatpush.bf16.msra.mxu0 0
  %453 = vmatpush.bf16.msra.mxu0 0
  %454 = vmatpush.bf16.msra.mxu0 %v432
  %455 = vmatpush.bf16.msra.mxu0 %v420
  %456 = vmatmul.bf16.gmra.mxu0 %v104
  %v457 = vpop.f32.mrf.mxu0
  %v458 = vadd.f32 %v444, %v457
  %v459 = vpop.f32.mrf.mxu0
  %v460 = vadd.f32 %v446, %v459
  %461 = vdwg.mxu0
  %v462 = vmax.f32 %v134, %v242
  %v463 = vmax.f32 %v136, %v244
  %v464 = vmax.f32 %v350, %v458
  %v465 = vmax.f32 %v352, %v460
  %v466 = vmax.f32 %v462, %v464
  %v467 = vmax.f32 %v463, %v465
  %v468 = vld [vmem:[%s2] sm:$0xff]
  %v469 = vld [vmem:[%s2 + $0x8] sm:$0xff]
  %471 = vset.pattern.permute.xlu0 0
  %472 = vperm.xlu0 %471, %v468
  %v473 = vpop.permute.xlu0 %472
  %476 = vset.pattern.permute.xlu0 0
  %477 = vperm.xlu0 %476, %v469
  %v478 = vpop.permute.xlu0 %477
  %v480 = vadd.f32 %v466, %v473
  %v481 = vadd.f32 %v467, %v478
  %v482 = vmax.f32 %v480, 0.0
  %v483 = vmax.f32 %v481, 0.0
  %vm484 = vcmask 408576
  %485 = vst.msk [vmem:[%s3] sm:$0xff] %vm484, %v482
  %486 = vst.msk [vmem:[%s3 + $0x8] sm:$0xff] %vm484, %v483
  // Predicated region
  $region14: #{lenet_forward.4} parent=0 // pred_check
    _
  $region15: #{lenet_forward.4} parent=0 // pred_check_branch
    %488 = sbr.rel (0) target = $region17
  $region16: #{lenet_forward.4} parent=0 // pred_region
    _
  $region17: #{lenet_forward.4} parent=0 // pred_fallthru
    _
  // Predicated region
  $region18: #{lenet_forward.4} parent=0 // pred_check
    _
  $region19: #{lenet_forward.4} parent=0 // pred_check_branch
    %490 = sbr.rel (0) target = $region21
  $region20: #{lenet_forward.4} parent=0 // pred_region
    _
  $region21: #{lenet_forward.4} parent=0 // pred_fallthru
    _

// kernel: lenet_forward.5
$region0: #{lenet_forward.5}
  #allocation0 [shape = 'u32[]', space=smem, size = 0x4, offset = 0x4, fixed_abs, tag = 'smem constant byte address 0x4 - core index']
  #allocation1 [shape = 'u32[72,128]{1,0:T(1,128)}', space=vmem, size = 0x9000, scoped, tag = 'internal scratch']
  %s0 = inlined_call_operand.vmem [shape: bf16[2,400], index: 0, kind: input, shape index: {}]
  %s1 = inlined_call_operand.vmem [shape: bf16[400,120], index: 1, kind: input, shape index: {}]
  %s2 = inlined_call_operand.vmem [shape: f32[1,120], index: 2, kind: input, shape index: {}]
  %s3 = inlined_call_operand.vmem [shape: bf16[120,84], index: 3, kind: input, shape index: {}]
  %s4 = inlined_call_operand.vmem [shape: f32[1,84], index: 4, kind: input, shape index: {}]
  %s5 = inlined_call_operand.vmem [shape: bf16[84,10], index: 5, kind: input, shape index: {}]
  %s6 = inlined_call_operand.vmem [shape: f32[1,10], index: 6, kind: input, shape index: {}]
  %s7 = inlined_call_operand.hbm [shape: f32[2,10], index: 7, kind: output, shape index: {}]
  %s8 = sld [smem:[#allocation0]]
  $region38: #{lenet_forward.5} parent=0
    _
  %s10 = ssub.s32 1, %s8
  %s11 = scalar_select 0, %s10, %s8
  $region1: #{lenet_forward.5} parent=0
    #allocation2 [shape = 'u8[1024]{0}', space=vmem, size = 0x400, scoped, tag = 'output window, operand 0, single buffered']
    #allocation3 [shape = 's32[1]{0}', space=sflag, size = 0x4, scoped, tag = 'scoped memory for lenet_forward.5']
    %12 = vsyncpa [#allocation3], 0
    // Predicated region
    $region2: #{lenet_forward.5} parent=1 // pred_check
      _
    $region3: #{lenet_forward.5} parent=1 // pred_check_branch
      %14 = sbr.rel (0) target = $region5
    $region4: #{lenet_forward.5} parent=1 // pred_region
      _
    $region5: #{lenet_forward.5} parent=1 // pred_fallthru
      _
    // Predicated region
    $region6: #{lenet_forward.5} parent=1 // pred_check
      _
    $region7: #{lenet_forward.5} parent=1 // pred_check_branch
      %16 = sbr.rel (0) target = $region9
    $region8: #{lenet_forward.5} parent=1 // pred_region
      _
    $region9: #{lenet_forward.5} parent=1 // pred_fallthru
      _
    // Predicated region
    $region10: #{lenet_forward.5} parent=1 // pred_check
      _
    $region11: #{lenet_forward.5} parent=1 // pred_check_branch
      %18 = sbr.rel (0) target = $region13
    $region12: #{lenet_forward.5} parent=1 // pred_region
      _
    $region13: #{lenet_forward.5} parent=1 // pred_fallthru
      _
    // Predicated region
    $region14: #{lenet_forward.5} parent=1 // pred_check
      _
    $region15: #{lenet_forward.5} parent=1 // pred_check_branch
      %20 = sbr.rel (0) target = $region17
    $region16: #{lenet_forward.5} parent=1 // pred_region
      _
    $region17: #{lenet_forward.5} parent=1 // pred_fallthru
      _
    // Predicated region
    $region18: #{lenet_forward.5} parent=1 // pred_check
      _
    $region19: #{lenet_forward.5} parent=1 // pred_check_branch
      %22 = sbr.rel (0) target = $region21
    $region20: #{lenet_forward.5} parent=1 // pred_region
      _
    $region21: #{lenet_forward.5} parent=1 // pred_fallthru
      _
    // Predicated region
    $region22: #{lenet_forward.5} parent=1 // pred_check
      _
    $region23: #{lenet_forward.5} parent=1 // pred_check_branch
      %24 = sbr.rel (0) target = $region25
    $region24: #{lenet_forward.5} parent=1 // pred_region
      _
    $region25: #{lenet_forward.5} parent=1 // pred_fallthru
      _
    // Predicated region
    $region26: #{lenet_forward.5} parent=1 // pred_check
      _
    $region27: #{lenet_forward.5} parent=1 // pred_check_branch
      %26 = sbr.rel (0) target = $region29
    $region28: #{lenet_forward.5} parent=1 // pred_region
      _
    $region29: #{lenet_forward.5} parent=1 // pred_fallthru
      _
    %v28 = vld [vmem:[%s0] sm:$0xf]
    %v29 = vld [vmem:[%s1] sm:$0xf]
    %v30 = vld [vmem:[%s1 + $0x4] sm:$0xf]
    %v31 = vld [vmem:[%s1 + $0x8] sm:$0xf]
    %v32 = vld [vmem:[%s1 + $0xc] sm:$0xf]
    %v33 = vld [vmem:[%s1 + $0x10] sm:$0xf]
    %v34 = vld [vmem:[%s1 + $0x14] sm:$0xf]
    %v35 = vld [vmem:[%s1 + $0x18] sm:$0xf]
    %v36 = vld [vmem:[%s1 + $0x1c] sm:$0xf]
    %v37 = vld [vmem:[%s1 + $0x20] sm:$0xf]
    %v38 = vld [vmem:[%s1 + $0x24] sm:$0xf]
    %v39 = vld [vmem:[%s1 + $0x28] sm:$0xf]
    %v40 = vld [vmem:[%s1 + $0x2c] sm:$0xf]
    %v41 = vld [vmem:[%s1 + $0x30] sm:$0xf]
    %v42 = vld [vmem:[%s1 + $0x34] sm:$0xf]
    %v43 = vld [vmem:[%s1 + $0x38] sm:$0xf]
    %v44 = vld [vmem:[%s1 + $0x3c] sm:$0xf]
    %v45 = vld [vmem:[%s1 + $0x40] sm:$0xf]
    %v46 = vld [vmem:[%s1 + $0x44] sm:$0xf]
    %v47 = vld [vmem:[%s1 + $0x48] sm:$0xf]
    %v48 = vld [vmem:[%s1 + $0x4c] sm:$0xf]
    %v49 = vld [vmem:[%s1 + $0x50] sm:$0xf]
    %v50 = vld [vmem:[%s1 + $0x54] sm:$0xf]
    %v51 = vld [vmem:[%s1 + $0x58] sm:$0xf]
    %v52 = vld [vmem:[%s1 + $0x5c] sm:$0xf]
    %v53 = vld [vmem:[%s1 + $0x60] sm:$0xf]
    %v54 = vld [vmem:[%s1 + $0x64] sm:$0xf]
    %v55 = vld [vmem:[%s1 + $0x68] sm:$0xf]
    %v56 = vld [vmem:[%s1 + $0x6c] sm:$0xf]
    %v57 = vld [vmem:[%s1 + $0x70] sm:$0xf]
    %v58 = vld [vmem:[%s1 + $0x74] sm:$0xf]
    %v59 = vld [vmem:[%s1 + $0x78] sm:$0xf]
    %v60 = vld [vmem:[%s1 + $0x7c] sm:$0xf]
    %v61 = vld [vmem:[%s1 + $0x80] sm:$0xf]
    %v62 = vld [vmem:[%s1 + $0x84] sm:$0xf]
    %v63 = vld [vmem:[%s1 + $0x88] sm:$0xf]
    %v64 = vld [vmem:[%s1 + $0x8c] sm:$0xf]
    %v65 = vld [vmem:[%s1 + $0x90] sm:$0xf]
    %v66 = vld [vmem:[%s1 + $0x94] sm:$0xf]
    %v67 = vld [vmem:[%s1 + $0x98] sm:$0xf]
    %v68 = vld [vmem:[%s1 + $0x9c] sm:$0xf]
    %v69 = vld [vmem:[%s1 + $0xa0] sm:$0xf]
    %v70 = vld [vmem:[%s1 + $0xa4] sm:$0xf]
    %v71 = vld [vmem:[%s1 + $0xa8] sm:$0xf]
    %v72 = vld [vmem:[%s1 + $0xac] sm:$0xf]
    %v73 = vld [vmem:[%s1 + $0xb0] sm:$0xf]
    %v74 = vld [vmem:[%s1 + $0xb4] sm:$0xf]
    %v75 = vld [vmem:[%s1 + $0xb8] sm:$0xf]
    %v76 = vld [vmem:[%s1 + $0xbc] sm:$0xf]
    %v77 = vld [vmem:[%s1 + $0xc0] sm:$0xf]
    %v78 = vld [vmem:[%s1 + $0xc4] sm:$0xf]
    %v79 = vld [vmem:[%s2] sm:$0x1]
    %v81 = vperm.slane %v79, 0
    %84 = vst [vmem:[#allocation1] ss:$9 sm:$0xff] %v28
    %v85 = vld [vmem:[#allocation1] sm:$0xff]
    %v86 = vld [vmem:[#allocation1 + $0x9] sm:$0xff]
    %v87 = vld [vmem:[#allocation1 + $0x12] sm:$0xff]
    %v88 = vld [vmem:[#allocation1 + $0x1b] sm:$0xff]
    %v142 = vunpack.c.l.b16 %v29
    %v143 = vunpack.c.l.b16 %v30
    %v144 = vunpack.c.l.b16 %v31
    %v145 = vunpack.c.l.b16 %v32
    %v146 = vunpack.c.l.b16 %v33
    %v147 = vunpack.c.l.b16 %v34
    %v148 = vunpack.c.l.b16 %v35
    %v149 = vunpack.c.l.b16 %v36
    %v150 = vunpack.c.l.b16 %v37
    %v151 = vunpack.c.l.b16 %v38
    %v152 = vunpack.c.l.b16 %v39
    %v153 = vunpack.c.l.b16 %v40
    %v154 = vunpack.c.l.b16 %v41
    %v155 = vunpack.c.l.b16 %v42
    %v156 = vunpack.c.l.b16 %v43
    %v157 = vunpack.c.l.b16 %v44
    %v158 = vunpack.c.l.b16 %v45
    %v159 = vunpack.c.l.b16 %v46
    %v160 = vunpack.c.l.b16 %v47
    %v161 = vunpack.c.l.b16 %v48
    %v162 = vunpack.c.l.b16 %v49
    %v163 = vunpack.c.l.b16 %v50
    %v164 = vunpack.c.l.b16 %v51
    %v165 = vunpack.c.l.b16 %v52
    %v166 = vunpack.c.l.b16 %v53
    %v167 = vunpack.c.l.b16 %v54
    %v168 = vunpack.c.l.b16 %v55
    %v169 = vunpack.c.l.b16 %v56
    %v170 = vunpack.c.l.b16 %v57
    %v171 = vunpack.c.l.b16 %v58
    %v172 = vunpack.c.l.b16 %v59
    %v173 = vunpack.c.l.b16 %v60
    %v174 = vunpack.c.l.b16 %v61
    %v175 = vunpack.c.l.b16 %v62
    %v176 = vunpack.c.l.b16 %v63
    %v177 = vunpack.c.l.b16 %v64
    %v178 = vunpack.c.l.b16 %v65
    %v179 = vunpack.c.l.b16 %v66
    %v180 = vunpack.c.l.b16 %v67
    %v181 = vunpack.c.l.b16 %v68
    %v182 = vunpack.c.l.b16 %v69
    %v183 = vunpack.c.l.b16 %v70
    %v184 = vunpack.c.l.b16 %v71
    %v185 = vunpack.c.l.b16 %v72
    %v186 = vunpack.c.l.b16 %v73
    %v187 = vunpack.c.l.b16 %v74
    %v188 = vunpack.c.l.b16 %v75
    %v189 = vunpack.c.l.b16 %v76
    %v190 = vunpack.c.l.b16 %v77
    %v191 = vunpack.c.l.b16 %v78
    %v192 = vpack.c.b16 %v143, %v142
    %v193 = vpack.c.b16 %v145, %v144
    %v194 = vpack.c.b16 %v147, %v146
    %v195 = vpack.c.b16 %v149, %v148
    %v196 = vpack.c.b16 %v151, %v150
    %v197 = vpack.c.b16 %v153, %v152
    %v198 = vpack.c.b16 %v155, %v154
    %v199 = vpack.c.b16 %v157, %v156
    %v200 = vpack.c.b16 %v159, %v158
    %v201 = vpack.c.b16 %v161, %v160
    %v202 = vpack.c.b16 %v163, %v162
    %v203 = vpack.c.b16 %v165, %v164
    %v204 = vpack.c.b16 %v167, %v166
    %v205 = vpack.c.b16 %v169, %v168
    %v206 = vpack.c.b16 %v171, %v170
    %v207 = vpack.c.b16 %v173, %v172
    %v208 = vpack.c.b16 %v175, %v174
    %v209 = vpack.c.b16 %v177, %v176
    %v210 = vpack.c.b16 %v179, %v178
    %v211 = vpack.c.b16 %v181, %v180
    %v212 = vpack.c.b16 %v183, %v182
    %v213 = vpack.c.b16 %v185, %v184
    %v214 = vpack.c.b16 %v187, %v186
    %v215 = vpack.c.b16 %v189, %v188
    %v216 = vpack.c.b16 %v191, %v190
    %vm242 = vcmask 130048
    %v243 = vsel %vm242, %v88, 0
    %245 = vmatpush.bf16.msra.mxu0 %v199
    %246 = vmatpush.bf16.msra.mxu0 %v198
    %247 = vmatpush.bf16.msra.mxu0 %v197
    %248 = vmatpush.bf16.msra.mxu0 %v196
    %249 = vmatpush.bf16.msra.mxu0 %v195
    %250 = vmatpush.bf16.msra.mxu0 %v194
    %251 = vmatpush.bf16.msra.mxu0 %v193
    %252 = vmatpush.bf16.msra.mxu0 %v192
    %253 = vmatmul.bf16.gmra.mxu0 %v85
    %v254 = vpop.f32.mrf.mxu0
    %v255 = vadd.f32 %v81, %v254
    %v256 = vpop.f32.mrf.mxu0
    %257 = vdwg.mxu0
    %258 = vmatpush.bf16.msra.mxu0 %v207
    %259 = vmatpush.bf16.msra.mxu0 %v206
    %260 = vmatpush.bf16.msra.mxu0 %v205
    %261 = vmatpush.bf16.msra.mxu0 %v204
    %262 = vmatpush.bf16.msra.mxu0 %v203
    %263 = vmatpush.bf16.msra.mxu0 %v202
    %264 = vmatpush.bf16.msra.mxu0 %v201
    %265 = vmatpush.bf16.msra.mxu0 %v200
    %266 = vmatmul.bf16.gmra.mxu0 %v86
    %v267 = vpop.f32.mrf.mxu0
    %v268 = vadd.f32 %v255, %v267
    %v269 = vpop.f32.mrf.mxu0
    %270 = vdwg.mxu0
    %271 = vmatpush.bf16.msra.mxu0 %v215
    %272 = vmatpush.bf16.msra.mxu0 %v214
    %273 = vmatpush.bf16.msra.mxu0 %v213
    %274 = vmatpush.bf16.msra.mxu0 %v212
    %275 = vmatpush.bf16.msra.mxu0 %v211
    %276 = vmatpush.bf16.msra.mxu0 %v210
    %277 = vmatpush.bf16.msra.mxu0 %v209
    %278 = vmatpush.bf16.msra.mxu0 %v208
    %279 = vmatmul.bf16.gmra.mxu0 %v87
    %v280 = vpop.f32.mrf.mxu0
    %v281 = vadd.f32 %v268, %v280
    %v282 = vpop.f32.mrf.mxu0
    %283 = vdwg.mxu0
    %284 = vmatpush.bf16.msra.mxu0 0
    %285 = vmatpush.bf16.msra.mxu0 0
    %286 = vmatpush.bf16.msra.mxu0 0
    %287 = vmatpush.bf16.msra.mxu0 0
    %288 = vmatpush.bf16.msra.mxu0 0
    %289 = vmatpush.bf16.msra.mxu0 0
    %290 = vmatpush.bf16.msra.mxu0 0
    %291 = vmatpush.bf16.msra.mxu0 %v216
    %292 = vmatmul.bf16.gmra.mxu0 %v243
    %v293 = vpop.f32.mrf.mxu0
    %v294 = vadd.f32 %v281, %v293
    %v295 = vpop.f32.mrf.mxu0
    %296 = vdwg.mxu0
    %v297 = vmax.f32 %v294, 0.0
    %v298 = vpack.c.bf16 %v297, %v297
    %v299 = vld [vmem:[%s3] sm:$0xf]
    %v300 = vld [vmem:[%s3 + $0x4] sm:$0xf]
    %v301 = vld [vmem:[%s3 + $0x8] sm:$0xf]
    %v302 = vld [vmem:[%s3 + $0xc] sm:$0xf]
    %v303 = vld [vmem:[%s3 + $0x10] sm:$0xf]
    %v304 = vld [vmem:[%s3 + $0x14] sm:$0xf]
    %v305 = vld [vmem:[%s3 + $0x18] sm:$0xf]
    %v306 = vld [vmem:[%s3 + $0x1c] sm:$0xf]
    %v307 = vld [vmem:[%s3 + $0x20] sm:$0xf]
    %v308 = vld [vmem:[%s3 + $0x24] sm:$0xf]
    %v309 = vld [vmem:[%s3 + $0x28] sm:$0xf]
    %v310 = vld [vmem:[%s3 + $0x2c] sm:$0xf]
    %v311 = vld [vmem:[%s3 + $0x30] sm:$0xf]
    %v312 = vld [vmem:[%s3 + $0x34] sm:$0xf]
    %v313 = vld [vmem:[%s3 + $0x38] sm:$0xf]
    %v314 = vld [vmem:[%s4] sm:$0x1]
    %v316 = vperm.slane %v314, 0
    %v333 = vunpack.c.l.b16 %v299
    %v334 = vunpack.c.l.b16 %v300
    %v335 = vunpack.c.l.b16 %v301
    %v336 = vunpack.c.l.b16 %v302
    %v337 = vunpack.c.l.b16 %v303
    %v338 = vunpack.c.l.b16 %v304
    %v339 = vunpack.c.l.b16 %v305
    %v340 = vunpack.c.l.b16 %v306
    %v341 = vunpack.c.l.b16 %v307
    %v342 = vunpack.c.l.b16 %v308
    %v343 = vunpack.c.l.b16 %v309
    %v344 = vunpack.c.l.b16 %v310
    %v345 = vunpack.c.l.b16 %v311
    %v346 = vunpack.c.l.b16 %v312
    %v347 = vunpack.c.l.b16 %v313
    %v348 = vpack.c.b16 %v334, %v333
    %v349 = vpack.c.b16 %v336, %v335
    %v350 = vpack.c.b16 %v338, %v337
    %v351 = vpack.c.b16 %v340, %v339
    %v352 = vpack.c.b16 %v342, %v341
    %v353 = vpack.c.b16 %v344, %v343
    %v354 = vpack.c.b16 %v346, %v345
    %v355 = vpack.c.b16 %v347, %v347
    %vm363 = vcmask 982016
    %v365 = vsel %vm363, %v298, 0
    %vm367 = vcmask 1043456
    %v369 = vsel %vm367, %v355, 0
    %371 = vmatpush.bf16.msra.mxu0 %v369
    %372 = vmatpush.bf16.msra.mxu0 %v354
    %373 = vmatpush.bf16.msra.mxu0 %v353
    %374 = vmatpush.bf16.msra.mxu0 %v352
    %375 = vmatpush.bf16.msra.mxu0 %v351
    %376 = vmatpush.bf16.msra.mxu0 %v350
    %377 = vmatpush.bf16.msra.mxu0 %v349
    %378 = vmatpush.bf16.msra.mxu0 %v348
    %379 = vmatmul.bf16.gmra.mxu0 %v365
    %v380 = vpop.f32.mrf.mxu0
    %v381 = vadd.f32 %v316, %v380
    %v382 = vpop.f32.mrf.mxu0
    %383 = vdwg.mxu0
    %v384 = vmax.f32 %v381, 0.0
    %v385 = vpack.c.bf16 %v384, %v384
    %v386 = vld [vmem:[%s5] sm:$0xf]
    %v387 = vld [vmem:[%s5 + $0x4] sm:$0xf]
    %v388 = vld [vmem:[%s5 + $0x8] sm:$0xf]
    %v389 = vld [vmem:[%s5 + $0xc] sm:$0xf]
    %v390 = vld [vmem:[%s5 + $0x10] sm:$0xf]
    %v391 = vld [vmem:[%s5 + $0x14] sm:$0xf]
    %v392 = vld [vmem:[%s5 + $0x18] sm:$0xf]
    %v393 = vld [vmem:[%s5 + $0x1c] sm:$0xf]
    %v394 = vld [vmem:[%s5 + $0x20] sm:$0xf]
    %v395 = vld [vmem:[%s5 + $0x24] sm:$0xf]
    %v396 = vld [vmem:[%s5 + $0x28] sm:$0x3]
    %v397 = vld [vmem:[%s6] sm:$0x1]
    %v399 = vperm.slane %v397, 0
    %v412 = vunpack.c.l.b16 %v386
    %v413 = vunpack.c.l.b16 %v387
    %v414 = vunpack.c.l.b16 %v388
    %v415 = vunpack.c.l.b16 %v389
    %v416 = vunpack.c.l.b16 %v390
    %v417 = vunpack.c.l.b16 %v391
    %v418 = vunpack.c.l.b16 %v392
    %v419 = vunpack.c.l.b16 %v393
    %v420 = vunpack.c.l.b16 %v394
    %v421 = vunpack.c.l.b16 %v395
    %v422 = vunpack.c.l.b16 %v396
    %v423 = vpack.c.b16 %v413, %v412
    %v424 = vpack.c.b16 %v415, %v414
    %v425 = vpack.c.b16 %v417, %v416
    %v426 = vpack.c.b16 %v419, %v418
    %v427 = vpack.c.b16 %v421, %v420
    %v428 = vpack.c.b16 %v422, %v422
    %vm434 = vcmask 687104
    %v436 = vsel %vm434, %v385, 0
    %vm438 = vcmask 1041408
    %v440 = vsel %vm438, %v428, 0
    %442 = vmatpush.bf16.msra.mxu0 0
    %443 = vmatpush.bf16.msra.mxu0 0
    %444 = vmatpush.bf16.msra.mxu0 %v440
    %445 = vmatpush.bf16.msra.mxu0 %v427
    %446 = vmatpush.bf16.msra.mxu0 %v426
    %447 = vmatpush.bf16.msra.mxu0 %v425
    %448 = vmatpush.bf16.msra.mxu0 %v424
    %449 = vmatpush.bf16.msra.mxu0 %v423
    %450 = vmatmul.bf16.gmra.mxu0 %v436
    %v451 = vpop.f32.mrf.mxu0
    %v452 = vadd.f32 %v399, %v451
    %v453 = vpop.f32.mrf.mxu0
    %454 = vdwg.mxu0
    %vm455 = vcmask 74752
    %456 = vst.msk [vmem:[#allocation2] sm:$0x3] %vm455, %v452
    // Predicated region
    $region30: #{lenet_forward.5} parent=1 // pred_check
      _
    $region31: #{lenet_forward.5} parent=1 // pred_check_branch
      %458 = sbr.rel (0) target = $region33
    $region32: #{lenet_forward.5} parent=1 // pred_region
      %460 = vsyncadd [#allocation3], 0
      %s462 = sshll.u32 [#allocation2], 4
      %s463 = int_to_ptr.vmem [resolvable:$true] %s462
      %s464 = sshll.u32 %s7, 4
      %s465 = int_to_ptr.hbm [resolvable:$true] %s464
      %467 = dma.vmem_to_hbm [thread:$0]  %s463, 32, %s465, [#allocation3]
    $region33: #{lenet_forward.5} parent=1 // pred_fallthru
      _
    // Predicated region
    $region34: #{lenet_forward.5} parent=1 // pred_check
      _
    $region35: #{lenet_forward.5} parent=1 // pred_check_branch
      %469 = sbr.rel (0) target = $region37
    $region36: #{lenet_forward.5} parent=1 // pred_region
      %471 = dma.done [#allocation3], 32
    $region37: #{lenet_forward.5} parent=1 // pred_fallthru
      _
    %472 = vsyncpa [#allocation3], 1

</llo_original>
